<compile_context>
chip_gen: v7x
topology: tpu7x:2x2x1
jax: 0.10.0
libtpu: 0.0.40
codegen_flags: <defaults>
</compile_context>

<pallas_src>
import jax
import jax.numpy as jnp
from jax.experimental import pallas as pl
from jax.experimental.pallas import tpu as pltpu

BLOCK_L = 512  # batch tile along the lane axis (multiple of 128)


def _round_up(x, m):
    return (x + m - 1) // m * m


def mix_kernel(reg_ref,                                   # SMEM (5,): [r0_0, r0_1, r1_0, r1_1, r2_0]
               u_ref,                                     # VMEM (3, BLOCK_L)  state, batch on lanes
               w1, b1, w2, b2, w3, b3, w4, b4, w5, b5,    # VMEM MLP params, (out,in) / (out,1)
               out_ref):                                  # VMEM (3, BLOCK_L)
    u0 = u_ref[0:1, :]            # (1, L)
    u1 = u_ref[1:2, :]
    u2 = u_ref[2:3, :]

    # Layer 1 (1 -> 5) is a rank-1 outer product: keep it on the VPU as a
    # broadcast FMA instead of an MXU push/drain round trip.
    h = jnp.maximum(w1[...] * u0 + b1[...], 0.0)                                             # (5, L)
    # Layers 2..5 on the MXU; contraction output is lane-dense (N = BLOCK_L).
    h = jnp.maximum(jnp.dot(w2[...], h, preferred_element_type=jnp.float32) + b2[...], 0.0)  # (10, L)
    h = jnp.maximum(jnp.dot(w3[...], h, preferred_element_type=jnp.float32) + b3[...], 0.0)  # (20, L)
    h = jnp.maximum(jnp.dot(w4[...], h, preferred_element_type=jnp.float32) + b4[...], 0.0)  # (5, L)
    o = jnp.dot(w5[...], h, preferred_element_type=jnp.float32) + b5[...]                    # (9, L)

    # Bias-free 2->1 / 1->1 regressions unrolled as SMEM-scalar * lane vector.
    r00 = reg_ref[0]
    r01 = reg_ref[1]
    r10 = reg_ref[2]
    r11 = reg_ref[3]
    r20 = reg_ref[4]

    u0u1 = u0 * u1
    x_dyn = u2 * r00 + u0u1 * r01 + o[0:1, :] + o[3:4, :] * u1 + o[4:5, :] * u2
    y_dyn = (u0 * u0) * r10 + (u0 * u2) * r11 + o[1:2, :] + o[5:6, :] * u1 + o[6:7, :] * u2
    # NOTE: the original PyTorch module multiplies BOTH trailing z_dyn terms by
    # u[:, [1]] (not u[:, [2]]); we keep that semantics verbatim.
    z_dyn = u0u1 * r20 + o[2:3, :] + o[7:8, :] * u1 + o[8:9, :] * u1

    # Three full-row, lane-dense stores (no concatenate / masked partial stores).
    out_ref[0:1, :] = x_dyn
    out_ref[1:2, :] = y_dyn
    out_ref[2:3, :] = z_dyn


def init_params(key):
    """Deterministic synthetic parameters matching the PyTorch module shapes.

    Linear weights are kept in PyTorch (out_features, in_features) orientation;
    biases are stored as (out_features, 1) columns for the transposed layout.
    """
    dims = [(1, 5), (5, 10), (10, 20), (20, 5), (5, 9)]
    keys = jax.random.split(key, 2 * len(dims) + 3)
    params = {}
    for li, (fin, fout) in enumerate(dims):
        scale = 1.0 / jnp.sqrt(jnp.float32(fin))
        params[f"w{li + 1}"] = jax.random.uniform(
            keys[2 * li], (fout, fin), jnp.float32, -scale, scale)    # (out, in)
        params[f"b{li + 1}"] = jax.random.uniform(
            keys[2 * li + 1], (fout, 1), jnp.float32, -scale, scale)  # (out, 1)
    # reg0: Linear(2,1), reg1: Linear(2,1), reg2: Linear(1,1) -- all bias-free.
    r0 = jax.random.uniform(keys[-3], (2,), jnp.float32, -1.0, 1.0)
    r1 = jax.random.uniform(keys[-2], (2,), jnp.float32, -1.0, 1.0)
    r2 = jax.random.uniform(keys[-1], (1,), jnp.float32, -1.0, 1.0)
    params["reg"] = jnp.concatenate([r0, r1, r2]).astype(jnp.float32)  # (5,)
    return params


def mix_model(t, u, params):
    """Pallas-backed MixModel.forward(t, u). `t` is unused (ODE-style signature)."""
    del t
    n = u.shape[0]
    # Lane-dense tile: batch on the 128-wide lane axis; pad batch up to a
    # multiple of the block and slice the padding off afterwards.
    block_l = min(BLOCK_L, _round_up(n, 128))
    pad_n = _round_up(n, block_l)
    uT = u.T                                               # (3, n)
    if pad_n != n:
        uT = jnp.pad(uT, ((0, 0), (0, pad_n - n)))
    grid = (pad_n // block_l,)

    full = lambda a: pl.BlockSpec(a.shape, lambda i: (0, 0))
    in_specs = [
        pl.BlockSpec(memory_space=pltpu.MemorySpace.SMEM),   # reg scalars
        pl.BlockSpec((3, block_l), lambda i: (0, i)),        # uT tile
        full(params["w1"]), full(params["b1"]),
        full(params["w2"]), full(params["b2"]),
        full(params["w3"]), full(params["b3"]),
        full(params["w4"]), full(params["b4"]),
        full(params["w5"]), full(params["b5"]),
    ]
    out_spec = pl.BlockSpec((3, block_l), lambda i: (0, i))

    outT = pl.pallas_call(
        mix_kernel,
        out_shape=jax.ShapeDtypeStruct((3, pad_n), jnp.float32),
        grid=grid,
        in_specs=in_specs,
        out_specs=out_spec,
        compiler_params=pltpu.CompilerParams(dimension_semantics=("parallel",)),
    )(params["reg"], uT,
      params["w1"], params["b1"], params["w2"], params["b2"],
      params["w3"], params["b3"], params["w4"], params["b4"],
      params["w5"], params["b5"])

    return outT[:, :n].T                                   # back to (n, 3)


def mix_model_ref(t, u, params):
    """Pure-JAX reference of the PyTorch forward, for validation."""
    del t
    u0, u1, u2 = u[:, 0:1], u[:, 1:2], u[:, 2:3]
    h = u0
    for li in range(1, 5):
        h = jnp.maximum(h @ params[f"w{li}"].T + params[f"b{li}"].T, 0.0)
    outnet = h @ params["w5"].T + params["b5"].T
    reg = params["reg"]
    basis_x = jnp.concatenate([u2, u0 * u1], axis=1)
    basis_y = jnp.concatenate([u0 ** 2, u0 * u2], axis=1)
    basis_z = u0 * u1
    x_dyn = basis_x @ reg[0:2, None] + outnet[:, 0:1] + outnet[:, 3:4] * u1 + outnet[:, 4:5] * u2
    y_dyn = basis_y @ reg[2:4, None] + outnet[:, 1:2] + outnet[:, 5:6] * u1 + outnet[:, 6:7] * u2
    z_dyn = basis_z @ reg[4:5, None] + outnet[:, 2:3] + outnet[:, 7:8] * u1 + outnet[:, 8:9] * u1
    return jnp.concatenate([x_dyn, y_dyn, z_dyn], axis=1)


if __name__ == "__main__":
    key = jax.random.PRNGKey(0)
    pkey, ukey = jax.random.split(key)
    params = init_params(pkey)

    N = 640  # small demo batch; exercises padding and a multi-step (even) grid
    u = jax.random.normal(ukey, (N, 3), dtype=jnp.float32)
    t = jnp.zeros((), dtype=jnp.float32)  # unused, matches forward(t, u) signature

    out = jax.block_until_ready(mix_model(t, u, params))

    ref = mix_model_ref(t, u, params)
    assert out.shape == (N, 3)
    assert jnp.allclose(out, ref, rtol=1e-5, atol=1e-5), "Pallas output mismatch vs reference"

    print("KERNEL_OK")
</pallas_src>

<mosaic_0001>
module attributes {stable_mosaic.version = 11 : i64} {
  func.func @mix_kernel(%arg0: i32, %arg1: memref<5xf32, #tpu.memory_space<smem>>, %arg2: memref<3x512xf32, #tpu.memory_space<vmem>>, %arg3: memref<5x1xf32, #tpu.memory_space<vmem>>, %arg4: memref<5x1xf32, #tpu.memory_space<vmem>>, %arg5: memref<10x5xf32, #tpu.memory_space<vmem>>, %arg6: memref<10x1xf32, #tpu.memory_space<vmem>>, %arg7: memref<20x10xf32, #tpu.memory_space<vmem>>, %arg8: memref<20x1xf32, #tpu.memory_space<vmem>>, %arg9: memref<5x20xf32, #tpu.memory_space<vmem>>, %arg10: memref<5x1xf32, #tpu.memory_space<vmem>>, %arg11: memref<9x5xf32, #tpu.memory_space<vmem>>, %arg12: memref<9x1xf32, #tpu.memory_space<vmem>>, %arg13: memref<3x512xf32, #tpu.memory_space<vmem>>) attributes {dimension_semantics = [#tpu.dimension_semantics<parallel>], iteration_bounds = array<i64: 2>, scalar_prefetch = 0 : i64, scratch_operands = 0 : i64, tpu.core_type = #tpu.core_type<tc>, window_params = [{transform_indices = @transform_0, window_bounds = array<i64: 5>}, {transform_indices = @transform_1, window_bounds = array<i64: 3, 512>}, {pipeline_mode = #tpu.pipeline_mode<synchronous>, transform_indices = @transform_2, window_bounds = array<i64: 5, 1>}, {pipeline_mode = #tpu.pipeline_mode<synchronous>, transform_indices = @transform_3, window_bounds = array<i64: 5, 1>}, {pipeline_mode = #tpu.pipeline_mode<synchronous>, transform_indices = @transform_4, window_bounds = array<i64: 10, 5>}, {pipeline_mode = #tpu.pipeline_mode<synchronous>, transform_indices = @transform_5, window_bounds = array<i64: 10, 1>}, {pipeline_mode = #tpu.pipeline_mode<synchronous>, transform_indices = @transform_6, window_bounds = array<i64: 20, 10>}, {pipeline_mode = #tpu.pipeline_mode<synchronous>, transform_indices = @transform_7, window_bounds = array<i64: 20, 1>}, {pipeline_mode = #tpu.pipeline_mode<synchronous>, transform_indices = @transform_8, window_bounds = array<i64: 5, 20>}, {pipeline_mode = #tpu.pipeline_mode<synchronous>, transform_indices = @transform_9, window_bounds = array<i64: 5, 1>}, {pipeline_mode = #tpu.pipeline_mode<synchronous>, transform_indices = @transform_10, window_bounds = array<i64: 9, 5>}, {pipeline_mode = #tpu.pipeline_mode<synchronous>, transform_indices = @transform_11, window_bounds = array<i64: 9, 1>}, {transform_indices = @transform_12, window_bounds = array<i64: 3, 512>}]} {
    %c0 = arith.constant 0 : index
    %c0_0 = arith.constant 0 : index
    %0 = vector.load %arg2[%c0, %c0_0] : memref<3x512xf32, #tpu.memory_space<vmem>>, vector<1x512xf32>
    %c1 = arith.constant 1 : index
    %c0_1 = arith.constant 0 : index
    %1 = vector.load %arg2[%c1, %c0_1] : memref<3x512xf32, #tpu.memory_space<vmem>>, vector<1x512xf32>
    %c2 = arith.constant 2 : index
    %c0_2 = arith.constant 0 : index
    %2 = vector.load %arg2[%c2, %c0_2] : memref<3x512xf32, #tpu.memory_space<vmem>>, vector<1x512xf32>
    %c0_3 = arith.constant 0 : index
    %c0_4 = arith.constant 0 : index
    %3 = vector.load %arg3[%c0_3, %c0_4] : memref<5x1xf32, #tpu.memory_space<vmem>>, vector<5x1xf32>
    %4 = vector.broadcast %3 : vector<5x1xf32> to vector<5x512xf32>
    %5 = vector.broadcast %0 : vector<1x512xf32> to vector<5x512xf32>
    %6 = arith.mulf %4, %5 : vector<5x512xf32>
    %c0_5 = arith.constant 0 : index
    %c0_6 = arith.constant 0 : index
    %7 = vector.load %arg4[%c0_5, %c0_6] : memref<5x1xf32, #tpu.memory_space<vmem>>, vector<5x1xf32>
    %8 = vector.broadcast %7 : vector<5x1xf32> to vector<5x512xf32>
    %9 = arith.addf %6, %8 : vector<5x512xf32>
    %cst = arith.constant 0.000000e+00 : f32
    %10 = vector.broadcast %cst : f32 to vector<5x512xf32>
    %11 = arith.maximumf %9, %10 : vector<5x512xf32>
    %c0_7 = arith.constant 0 : index
    %c0_8 = arith.constant 0 : index
    %12 = vector.load %arg5[%c0_7, %c0_8] : memref<10x5xf32, #tpu.memory_space<vmem>>, vector<10x5xf32>
    %cst_9 = arith.constant dense<0.000000e+00> : vector<10x512xf32>
    %13 = tpu.matmul %12, %11, %cst_9 {dimension_numbers = #tpu.dot_dimension_numbers<[1], [0], [0], [1], [0, 0, 1, 1], [], []>} : vector<10x5xf32>, vector<5x512xf32>, vector<10x512xf32> -> vector<10x512xf32>
    %c0_10 = arith.constant 0 : index
    %c0_11 = arith.constant 0 : index
    %14 = vector.load %arg6[%c0_10, %c0_11] : memref<10x1xf32, #tpu.memory_space<vmem>>, vector<10x1xf32>
    %15 = vector.broadcast %14 : vector<10x1xf32> to vector<10x512xf32>
    %16 = arith.addf %13, %15 : vector<10x512xf32>
    %cst_12 = arith.constant 0.000000e+00 : f32
    %17 = vector.broadcast %cst_12 : f32 to vector<10x512xf32>
    %18 = arith.maximumf %16, %17 : vector<10x512xf32>
    %c0_13 = arith.constant 0 : index
    %c0_14 = arith.constant 0 : index
    %19 = vector.load %arg7[%c0_13, %c0_14] : memref<20x10xf32, #tpu.memory_space<vmem>>, vector<20x10xf32>
    %cst_15 = arith.constant dense<0.000000e+00> : vector<20x512xf32>
    %20 = tpu.matmul %19, %18, %cst_15 {dimension_numbers = #tpu.dot_dimension_numbers<[1], [0], [0], [1], [0, 0, 1, 1], [], []>} : vector<20x10xf32>, vector<10x512xf32>, vector<20x512xf32> -> vector<20x512xf32>
    %c0_16 = arith.constant 0 : index
    %c0_17 = arith.constant 0 : index
    %21 = vector.load %arg8[%c0_16, %c0_17] : memref<20x1xf32, #tpu.memory_space<vmem>>, vector<20x1xf32>
    %22 = vector.broadcast %21 : vector<20x1xf32> to vector<20x512xf32>
    %23 = arith.addf %20, %22 : vector<20x512xf32>
    %cst_18 = arith.constant 0.000000e+00 : f32
    %24 = vector.broadcast %cst_18 : f32 to vector<20x512xf32>
    %25 = arith.maximumf %23, %24 : vector<20x512xf32>
    %c0_19 = arith.constant 0 : index
    %c0_20 = arith.constant 0 : index
    %26 = vector.load %arg9[%c0_19, %c0_20] : memref<5x20xf32, #tpu.memory_space<vmem>>, vector<5x20xf32>
    %cst_21 = arith.constant dense<0.000000e+00> : vector<5x512xf32>
    %27 = tpu.matmul %26, %25, %cst_21 {dimension_numbers = #tpu.dot_dimension_numbers<[1], [0], [0], [1], [0, 0, 1, 1], [], []>} : vector<5x20xf32>, vector<20x512xf32>, vector<5x512xf32> -> vector<5x512xf32>
    %c0_22 = arith.constant 0 : index
    %c0_23 = arith.constant 0 : index
    %28 = vector.load %arg10[%c0_22, %c0_23] : memref<5x1xf32, #tpu.memory_space<vmem>>, vector<5x1xf32>
    %29 = vector.broadcast %28 : vector<5x1xf32> to vector<5x512xf32>
    %30 = arith.addf %27, %29 : vector<5x512xf32>
    %cst_24 = arith.constant 0.000000e+00 : f32
    %31 = vector.broadcast %cst_24 : f32 to vector<5x512xf32>
    %32 = arith.maximumf %30, %31 : vector<5x512xf32>
    %c0_25 = arith.constant 0 : index
    %c0_26 = arith.constant 0 : index
    %33 = vector.load %arg11[%c0_25, %c0_26] : memref<9x5xf32, #tpu.memory_space<vmem>>, vector<9x5xf32>
    %cst_27 = arith.constant dense<0.000000e+00> : vector<9x512xf32>
    %34 = tpu.matmul %33, %32, %cst_27 {dimension_numbers = #tpu.dot_dimension_numbers<[1], [0], [0], [1], [0, 0, 1, 1], [], []>} : vector<9x5xf32>, vector<5x512xf32>, vector<9x512xf32> -> vector<9x512xf32>
    %c0_28 = arith.constant 0 : index
    %c0_29 = arith.constant 0 : index
    %35 = vector.load %arg12[%c0_28, %c0_29] : memref<9x1xf32, #tpu.memory_space<vmem>>, vector<9x1xf32>
    %36 = vector.broadcast %35 : vector<9x1xf32> to vector<9x512xf32>
    %37 = arith.addf %34, %36 : vector<9x512xf32>
    %c0_30 = arith.constant 0 : index
    %38 = memref.load %arg1[%c0_30] : memref<5xf32, #tpu.memory_space<smem>>
    %c1_31 = arith.constant 1 : index
    %39 = memref.load %arg1[%c1_31] : memref<5xf32, #tpu.memory_space<smem>>
    %c2_32 = arith.constant 2 : index
    %40 = memref.load %arg1[%c2_32] : memref<5xf32, #tpu.memory_space<smem>>
    %c3 = arith.constant 3 : index
    %41 = memref.load %arg1[%c3] : memref<5xf32, #tpu.memory_space<smem>>
    %c4 = arith.constant 4 : index
    %42 = memref.load %arg1[%c4] : memref<5xf32, #tpu.memory_space<smem>>
    %43 = arith.mulf %0, %1 : vector<1x512xf32>
    %44 = vector.broadcast %38 : f32 to vector<1x512xf32>
    %45 = arith.mulf %2, %44 : vector<1x512xf32>
    %46 = vector.broadcast %39 : f32 to vector<1x512xf32>
    %47 = arith.mulf %43, %46 : vector<1x512xf32>
    %48 = arith.addf %45, %47 : vector<1x512xf32>
    %49 = vector.extract_strided_slice %37 {offsets = [0, 0], sizes = [1, 512], strides = [1, 1]} : vector<9x512xf32> to vector<1x512xf32>
    %50 = arith.addf %48, %49 : vector<1x512xf32>
    %51 = vector.extract_strided_slice %37 {offsets = [3, 0], sizes = [1, 512], strides = [1, 1]} : vector<9x512xf32> to vector<1x512xf32>
    %52 = arith.mulf %51, %1 : vector<1x512xf32>
    %53 = arith.addf %50, %52 : vector<1x512xf32>
    %54 = vector.extract_strided_slice %37 {offsets = [4, 0], sizes = [1, 512], strides = [1, 1]} : vector<9x512xf32> to vector<1x512xf32>
    %55 = arith.mulf %54, %2 : vector<1x512xf32>
    %56 = arith.addf %53, %55 : vector<1x512xf32>
    %57 = arith.mulf %0, %0 : vector<1x512xf32>
    %58 = vector.broadcast %40 : f32 to vector<1x512xf32>
    %59 = arith.mulf %57, %58 : vector<1x512xf32>
    %60 = arith.mulf %0, %2 : vector<1x512xf32>
    %61 = vector.broadcast %41 : f32 to vector<1x512xf32>
    %62 = arith.mulf %60, %61 : vector<1x512xf32>
    %63 = arith.addf %59, %62 : vector<1x512xf32>
    %64 = vector.extract_strided_slice %37 {offsets = [1, 0], sizes = [1, 512], strides = [1, 1]} : vector<9x512xf32> to vector<1x512xf32>
    %65 = arith.addf %63, %64 : vector<1x512xf32>
    %66 = vector.extract_strided_slice %37 {offsets = [5, 0], sizes = [1, 512], strides = [1, 1]} : vector<9x512xf32> to vector<1x512xf32>
    %67 = arith.mulf %66, %1 : vector<1x512xf32>
    %68 = arith.addf %65, %67 : vector<1x512xf32>
    %69 = vector.extract_strided_slice %37 {offsets = [6, 0], sizes = [1, 512], strides = [1, 1]} : vector<9x512xf32> to vector<1x512xf32>
    %70 = arith.mulf %69, %2 : vector<1x512xf32>
    %71 = arith.addf %68, %70 : vector<1x512xf32>
    %72 = vector.broadcast %42 : f32 to vector<1x512xf32>
    %73 = arith.mulf %43, %72 : vector<1x512xf32>
    %74 = vector.extract_strided_slice %37 {offsets = [2, 0], sizes = [1, 512], strides = [1, 1]} : vector<9x512xf32> to vector<1x512xf32>
    %75 = arith.addf %73, %74 : vector<1x512xf32>
    %76 = vector.extract_strided_slice %37 {offsets = [7, 0], sizes = [1, 512], strides = [1, 1]} : vector<9x512xf32> to vector<1x512xf32>
    %77 = arith.mulf %76, %1 : vector<1x512xf32>
    %78 = arith.addf %75, %77 : vector<1x512xf32>
    %79 = vector.extract_strided_slice %37 {offsets = [8, 0], sizes = [1, 512], strides = [1, 1]} : vector<9x512xf32> to vector<1x512xf32>
    %80 = arith.mulf %79, %1 : vector<1x512xf32>
    %81 = arith.addf %78, %80 : vector<1x512xf32>
    %c0_33 = arith.constant 0 : index
    %c0_34 = arith.constant 0 : index
    %82 = vector.load %arg13[%c0_33, %c0_34] : memref<3x512xf32, #tpu.memory_space<vmem>>, vector<1x512xf32>
    tpu.vector_store %arg13[%c0_33, %c0_34], %56 {strides = array<i32>} : memref<3x512xf32, #tpu.memory_space<vmem>>, vector<1x512xf32>,
    %c1_35 = arith.constant 1 : index
    %c0_36 = arith.constant 0 : index
    %83 = vector.load %arg13[%c1_35, %c0_36] : memref<3x512xf32, #tpu.memory_space<vmem>>, vector<1x512xf32>
    tpu.vector_store %arg13[%c1_35, %c0_36], %71 {strides = array<i32>} : memref<3x512xf32, #tpu.memory_space<vmem>>, vector<1x512xf32>,
    %c2_37 = arith.constant 2 : index
    %c0_38 = arith.constant 0 : index
    %84 = vector.load %arg13[%c2_37, %c0_38] : memref<3x512xf32, #tpu.memory_space<vmem>>, vector<1x512xf32>
    tpu.vector_store %arg13[%c2_37, %c0_38], %81 {strides = array<i32>} : memref<3x512xf32, #tpu.memory_space<vmem>>, vector<1x512xf32>,
    return
  }
  func.func @transform_0(%arg0: i32) -> i32 {
    %c0_i32 = arith.constant 0 : i32
    %c0_i32_0 = arith.constant 0 : i32
    return %c0_i32 : i32
  }
  func.func @transform_1(%arg0: i32) -> (i32, i32) {
    %c0_i32 = arith.constant 0 : i32
    %c0_i32_0 = arith.constant 0 : i32
    return %c0_i32, %arg0 : i32, i32
  }
  func.func @transform_2(%arg0: i32) -> (i32, i32) {
    %c0_i32 = arith.constant 0 : i32
    %c0_i32_0 = arith.constant 0 : i32
    %c0_i32_1 = arith.constant 0 : i32
    return %c0_i32, %c0_i32_0 : i32, i32
  }
  func.func @transform_3(%arg0: i32) -> (i32, i32) {
    %c0_i32 = arith.constant 0 : i32
    %c0_i32_0 = arith.constant 0 : i32
    %c0_i32_1 = arith.constant 0 : i32
    return %c0_i32, %c0_i32_0 : i32, i32
  }
  func.func @transform_4(%arg0: i32) -> (i32, i32) {
    %c0_i32 = arith.constant 0 : i32
    %c0_i32_0 = arith.constant 0 : i32
    %c0_i32_1 = arith.constant 0 : i32
    return %c0_i32, %c0_i32_0 : i32, i32
  }
  func.func @transform_5(%arg0: i32) -> (i32, i32) {
    %c0_i32 = arith.constant 0 : i32
    %c0_i32_0 = arith.constant 0 : i32
    %c0_i32_1 = arith.constant 0 : i32
    return %c0_i32, %c0_i32_0 : i32, i32
  }
  func.func @transform_6(%arg0: i32) -> (i32, i32) {
    %c0_i32 = arith.constant 0 : i32
    %c0_i32_0 = arith.constant 0 : i32
    %c0_i32_1 = arith.constant 0 : i32
    return %c0_i32, %c0_i32_0 : i32, i32
  }
  func.func @transform_7(%arg0: i32) -> (i32, i32) {
    %c0_i32 = arith.constant 0 : i32
    %c0_i32_0 = arith.constant 0 : i32
    %c0_i32_1 = arith.constant 0 : i32
    return %c0_i32, %c0_i32_0 : i32, i32
  }
  func.func @transform_8(%arg0: i32) -> (i32, i32) {
    %c0_i32 = arith.constant 0 : i32
    %c0_i32_0 = arith.constant 0 : i32
    %c0_i32_1 = arith.constant 0 : i32
    return %c0_i32, %c0_i32_0 : i32, i32
  }
  func.func @transform_9(%arg0: i32) -> (i32, i32) {
    %c0_i32 = arith.constant 0 : i32
    %c0_i32_0 = arith.constant 0 : i32
    %c0_i32_1 = arith.constant 0 : i32
    return %c0_i32, %c0_i32_0 : i32, i32
  }
  func.func @transform_10(%arg0: i32) -> (i32, i32) {
    %c0_i32 = arith.constant 0 : i32
    %c0_i32_0 = arith.constant 0 : i32
    %c0_i32_1 = arith.constant 0 : i32
    return %c0_i32, %c0_i32_0 : i32, i32
  }
  func.func @transform_11(%arg0: i32) -> (i32, i32) {
    %c0_i32 = arith.constant 0 : i32
    %c0_i32_0 = arith.constant 0 : i32
    %c0_i32_1 = arith.constant 0 : i32
    return %c0_i32, %c0_i32_0 : i32, i32
  }
  func.func @transform_12(%arg0: i32) -> (i32, i32) {
    %c0_i32 = arith.constant 0 : i32
    %c0_i32_0 = arith.constant 0 : i32
    return %c0_i32, %arg0 : i32, i32
  }
}

</mosaic_0001>

<llo_original>
// kernel: tpu_custom_call.1
$region0: #{tpu_custom_call.1}
  #allocation0 [shape = 'u32[]', space=smem, size = 0x4, offset = 0x4, fixed_abs, tag = 'smem constant byte address 0x4 - core index']
  #allocation1 [shape = 'u32[144,128]{1,0:T(1,128)}', space=vmem, size = 0x12000, scoped, tag = 'internal scratch']
  %s0 = inlined_call_operand.vmem [shape: f32[5], index: 0, kind: input, shape index: {}]
  %s1 = inlined_call_operand.vmem [shape: f32[3,1024], index: 1, kind: input, shape index: {}]
  %s2 = inlined_call_operand.vmem [shape: f32[5,1], index: 2, kind: input, shape index: {}]
  %s3 = inlined_call_operand.vmem [shape: f32[5,1], index: 3, kind: input, shape index: {}]
  %s4 = inlined_call_operand.vmem [shape: f32[10,5], index: 4, kind: input, shape index: {}]
  %s5 = inlined_call_operand.vmem [shape: f32[10,1], index: 5, kind: input, shape index: {}]
  %s6 = inlined_call_operand.vmem [shape: f32[20,10], index: 6, kind: input, shape index: {}]
  %s7 = inlined_call_operand.vmem [shape: f32[20,1], index: 7, kind: input, shape index: {}]
  %s8 = inlined_call_operand.vmem [shape: f32[5,20], index: 8, kind: input, shape index: {}]
  %s9 = inlined_call_operand.vmem [shape: f32[5,1], index: 9, kind: input, shape index: {}]
  %s10 = inlined_call_operand.vmem [shape: f32[9,5], index: 10, kind: input, shape index: {}]
  %s11 = inlined_call_operand.vmem [shape: f32[9,1], index: 11, kind: input, shape index: {}]
  %s12 = inlined_call_operand.hbm [shape: f32[3,1024], index: 12, kind: output, shape index: {}]
  %s13 = sld [smem:[#allocation0]]
  $region85: #{tpu_custom_call.1} parent=0
    _
  %s15 = ssub.s32 1, %s13
  %s16 = scalar_select 0, %s15, %s13
  $region1: #{tpu_custom_call.1} parent=0
    #allocation2 [shape = 'u8[512]{0}', space=smem, size = 0x200, scoped, tag = 'input window, operand 0, single buffered']
    #allocation3 [shape = 's32[2]{0}', space=sflag, size = 0x8, scoped, tag = 'scoped memory for tpu_custom_call.1']
    #allocation4 [shape = 's32[2]{0}', space=sflag, size = 0x8, scoped, tag = 'scoped memory for tpu_custom_call.1']
    #allocation5 [shape = 'u8[16384]{0}', space=vmem, size = 0x4000, scoped, tag = 'output window, operand 0']
    %17 = vsyncpa [#allocation4], 0
    %18 = vsyncpa [#allocation3], 0
    %s19 = scalar_lea.sflag [#allocation3], 1
    %20 = vsyncpa %s19, 0
    loop: start=0, step=1, limit=4
    $region2: #{tpu_custom_call.1} parent=1 // loop_pre_header
      _
    $region3: #{tpu_custom_call.1} parent=1 // loop_header
      %s22 = sphi 0, %s26
      %p23 = scmp.ge.s32.totalorder %s22, 4
      %s30 = sphi 0, %s30
      %s32 = sphi 0, %s30
      %s33 = sphi 0, %s32
      %s47 = sphi 0, %s33
      %s53 = sphi 0, %s55
      %s56 = sphi 0, %s53
      %s57 = sphi 0, %s56
      %s73 = sphi 0, %s57
      %s77 = sphi 0, %s77
      %s79 = sphi 0, %s77
      %s80 = sphi 0, %s79
      %s94 = sphi 0, %s80
      %s98 = sphi 0, %s98
      %s100 = sphi 0, %s98
      %s101 = sphi 0, %s100
      %s115 = sphi 0, %s101
      %s119 = sphi 0, %s119
      %s121 = sphi 0, %s119
      %s122 = sphi 0, %s121
      %s136 = sphi 0, %s122
      %s140 = sphi 0, %s140
      %s142 = sphi 0, %s140
      %s143 = sphi 0, %s142
      %s157 = sphi 0, %s143
      %s161 = sphi 0, %s161
      %s163 = sphi 0, %s161
      %s164 = sphi 0, %s163
      %s178 = sphi 0, %s164
      %s182 = sphi 0, %s182
      %s184 = sphi 0, %s182
      %s185 = sphi 0, %s184
      %s199 = sphi 0, %s185
      %s203 = sphi 0, %s203
      %s205 = sphi 0, %s203
      %s206 = sphi 0, %s205
      %s220 = sphi 0, %s206
      %s224 = sphi 0, %s224
      %s226 = sphi 0, %s224
      %s227 = sphi 0, %s226
      %s241 = sphi 0, %s227
      %s245 = sphi 0, %s245
      %s247 = sphi 0, %s245
      %s248 = sphi 0, %s247
      %s262 = sphi 0, %s248
      %s266 = sphi 0, %s266
      %s268 = sphi 0, %s266
      %s269 = sphi 0, %s268
      %s283 = sphi 0, %s269
      %s289 = sphi 0, %s291
      %s292 = sphi 0, %s289
      %s293 = sphi 0, %s292
      %s309 = sphi 0, %s293
    $region4: #{tpu_custom_call.1} parent=1 // loop_header_branch
      %25 = sbr.rel (%p23) target = $region8
    $region5: #{tpu_custom_call.1} parent=1 // loop_body
      %s27 = ssub.s32 %s22, 1
      %s28 = ssub.s32 %s22, 2
      %s29 = sadd.s32 %s22, 1
      %s31 = sadd.s32 %s30, 1
      %p34 = scmp.eq.s32.totalorder %s22, 1
      %p35 = scmp.ne.s32.totalorder %s30, %s32
      %p36 = scmp.eq.s32.totalorder %s22, 0
      %p37 = por %p35, %p36
      %p38 = scmp.ne.s32.totalorder %s30, %s32
      %p39 = scmp.eq.s32.totalorder %s27, 1
      %p40 = por %p38, %p39
      %p41 = scmp.ne.s32.totalorder %s32, %s33
      %p42 = scmp.eq.s32.totalorder %s27, 0
      %p43 = por %p41, %p42
      %p44 = scmp.ne.s32.totalorder %s32, %s33
      %p45 = scmp.eq.s32.totalorder %s28, 1
      %p46 = por %p44, %p45
      %p48 = scmp.ne.s32.totalorder %s33, %s47
      %p49 = scmp.eq.s32.totalorder %s28, 0
      %p50 = por %p48, %p49
      %s51 = ssub.s32 %s22, %s29
      %p52 = scmp.eq.s32.totalorder %s51, 0
      %s54 = sadd.s32 %s53, 1
      %s55 = scalar_select %p52, %s53, %s54
      %p58 = pneg %p52
      %p59 = scmp.eq.s32.totalorder %s22, 1
      %p60 = por %p58, %p59
      %p61 = scmp.ne.s32.totalorder %s53, %s56
      %p62 = scmp.eq.s32.totalorder %s22, 0
      %p63 = por %p61, %p62
      %p64 = scmp.ne.s32.totalorder %s53, %s56
      %p65 = scmp.eq.s32.totalorder %s27, 1
      %p66 = por %p64, %p65
      %p67 = scmp.ne.s32.totalorder %s56, %s57
      %p68 = scmp.eq.s32.totalorder %s27, 0
      %p69 = por %p67, %p68
      %p70 = scmp.ne.s32.totalorder %s56, %s57
      %p71 = scmp.eq.s32.totalorder %s28, 1
      %p72 = por %p70, %p71
      %p74 = scmp.ne.s32.totalorder %s57, %s73
      %p75 = scmp.eq.s32.totalorder %s28, 0
      %p76 = por %p74, %p75
      %s78 = sadd.s32 %s77, 1
      %p81 = scmp.eq.s32.totalorder %s22, 1
      %p82 = scmp.ne.s32.totalorder %s77, %s79
      %p83 = scmp.eq.s32.totalorder %s22, 0
      %p84 = por %p82, %p83
      %p85 = scmp.ne.s32.totalorder %s77, %s79
      %p86 = scmp.eq.s32.totalorder %s27, 1
      %p87 = por %p85, %p86
      %p88 = scmp.ne.s32.totalorder %s79, %s80
      %p89 = scmp.eq.s32.totalorder %s27, 0
      %p90 = por %p88, %p89
      %p91 = scmp.ne.s32.totalorder %s79, %s80
      %p92 = scmp.eq.s32.totalorder %s28, 1
      %p93 = por %p91, %p92
      %p95 = scmp.ne.s32.totalorder %s80, %s94
      %p96 = scmp.eq.s32.totalorder %s28, 0
      %p97 = por %p95, %p96
      %s99 = sadd.s32 %s98, 1
      %p102 = scmp.eq.s32.totalorder %s22, 1
      %p103 = scmp.ne.s32.totalorder %s98, %s100
      %p104 = scmp.eq.s32.totalorder %s22, 0
      %p105 = por %p103, %p104
      %p106 = scmp.ne.s32.totalorder %s98, %s100
      %p107 = scmp.eq.s32.totalorder %s27, 1
      %p108 = por %p106, %p107
      %p109 = scmp.ne.s32.totalorder %s100, %s101
      %p110 = scmp.eq.s32.totalorder %s27, 0
      %p111 = por %p109, %p110
      %p112 = scmp.ne.s32.totalorder %s100, %s101
      %p113 = scmp.eq.s32.totalorder %s28, 1
      %p114 = por %p112, %p113
      %p116 = scmp.ne.s32.totalorder %s101, %s115
      %p117 = scmp.eq.s32.totalorder %s28, 0
      %p118 = por %p116, %p117
      %s120 = sadd.s32 %s119, 1
      %p123 = scmp.eq.s32.totalorder %s22, 1
      %p124 = scmp.ne.s32.totalorder %s119, %s121
      %p125 = scmp.eq.s32.totalorder %s22, 0
      %p126 = por %p124, %p125
      %p127 = scmp.ne.s32.totalorder %s119, %s121
      %p128 = scmp.eq.s32.totalorder %s27, 1
      %p129 = por %p127, %p128
      %p130 = scmp.ne.s32.totalorder %s121, %s122
      %p131 = scmp.eq.s32.totalorder %s27, 0
      %p132 = por %p130, %p131
      %p133 = scmp.ne.s32.totalorder %s121, %s122
      %p134 = scmp.eq.s32.totalorder %s28, 1
      %p135 = por %p133, %p134
      %p137 = scmp.ne.s32.totalorder %s122, %s136
      %p138 = scmp.eq.s32.totalorder %s28, 0
      %p139 = por %p137, %p138
      %s141 = sadd.s32 %s140, 1
      %p144 = scmp.eq.s32.totalorder %s22, 1
      %p145 = scmp.ne.s32.totalorder %s140, %s142
      %p146 = scmp.eq.s32.totalorder %s22, 0
      %p147 = por %p145, %p146
      %p148 = scmp.ne.s32.totalorder %s140, %s142
      %p149 = scmp.eq.s32.totalorder %s27, 1
      %p150 = por %p148, %p149
      %p151 = scmp.ne.s32.totalorder %s142, %s143
      %p152 = scmp.eq.s32.totalorder %s27, 0
      %p153 = por %p151, %p152
      %p154 = scmp.ne.s32.totalorder %s142, %s143
      %p155 = scmp.eq.s32.totalorder %s28, 1
      %p156 = por %p154, %p155
      %p158 = scmp.ne.s32.totalorder %s143, %s157
      %p159 = scmp.eq.s32.totalorder %s28, 0
      %p160 = por %p158, %p159
      %s162 = sadd.s32 %s161, 1
      %p165 = scmp.eq.s32.totalorder %s22, 1
      %p166 = scmp.ne.s32.totalorder %s161, %s163
      %p167 = scmp.eq.s32.totalorder %s22, 0
      %p168 = por %p166, %p167
      %p169 = scmp.ne.s32.totalorder %s161, %s163
      %p170 = scmp.eq.s32.totalorder %s27, 1
      %p171 = por %p169, %p170
      %p172 = scmp.ne.s32.totalorder %s163, %s164
      %p173 = scmp.eq.s32.totalorder %s27, 0
      %p174 = por %p172, %p173
      %p175 = scmp.ne.s32.totalorder %s163, %s164
      %p176 = scmp.eq.s32.totalorder %s28, 1
      %p177 = por %p175, %p176
      %p179 = scmp.ne.s32.totalorder %s164, %s178
      %p180 = scmp.eq.s32.totalorder %s28, 0
      %p181 = por %p179, %p180
      %s183 = sadd.s32 %s182, 1
      %p186 = scmp.eq.s32.totalorder %s22, 1
      %p187 = scmp.ne.s32.totalorder %s182, %s184
      %p188 = scmp.eq.s32.totalorder %s22, 0
      %p189 = por %p187, %p188
      %p190 = scmp.ne.s32.totalorder %s182, %s184
      %p191 = scmp.eq.s32.totalorder %s27, 1
      %p192 = por %p190, %p191
      %p193 = scmp.ne.s32.totalorder %s184, %s185
      %p194 = scmp.eq.s32.totalorder %s27, 0
      %p195 = por %p193, %p194
      %p196 = scmp.ne.s32.totalorder %s184, %s185
      %p197 = scmp.eq.s32.totalorder %s28, 1
      %p198 = por %p196, %p197
      %p200 = scmp.ne.s32.totalorder %s185, %s199
      %p201 = scmp.eq.s32.totalorder %s28, 0
      %p202 = por %p200, %p201
      %s204 = sadd.s32 %s203, 1
      %p207 = scmp.eq.s32.totalorder %s22, 1
      %p208 = scmp.ne.s32.totalorder %s203, %s205
      %p209 = scmp.eq.s32.totalorder %s22, 0
      %p210 = por %p208, %p209
      %p211 = scmp.ne.s32.totalorder %s203, %s205
      %p212 = scmp.eq.s32.totalorder %s27, 1
      %p213 = por %p211, %p212
      %p214 = scmp.ne.s32.totalorder %s205, %s206
      %p215 = scmp.eq.s32.totalorder %s27, 0
      %p216 = por %p214, %p215
      %p217 = scmp.ne.s32.totalorder %s205, %s206
      %p218 = scmp.eq.s32.totalorder %s28, 1
      %p219 = por %p217, %p218
      %p221 = scmp.ne.s32.totalorder %s206, %s220
      %p222 = scmp.eq.s32.totalorder %s28, 0
      %p223 = por %p221, %p222
      %s225 = sadd.s32 %s224, 1
      %p228 = scmp.eq.s32.totalorder %s22, 1
      %p229 = scmp.ne.s32.totalorder %s224, %s226
      %p230 = scmp.eq.s32.totalorder %s22, 0
      %p231 = por %p229, %p230
      %p232 = scmp.ne.s32.totalorder %s224, %s226
      %p233 = scmp.eq.s32.totalorder %s27, 1
      %p234 = por %p232, %p233
      %p235 = scmp.ne.s32.totalorder %s226, %s227
      %p236 = scmp.eq.s32.totalorder %s27, 0
      %p237 = por %p235, %p236
      %p238 = scmp.ne.s32.totalorder %s226, %s227
      %p239 = scmp.eq.s32.totalorder %s28, 1
      %p240 = por %p238, %p239
      %p242 = scmp.ne.s32.totalorder %s227, %s241
      %p243 = scmp.eq.s32.totalorder %s28, 0
      %p244 = por %p242, %p243
      %s246 = sadd.s32 %s245, 1
      %p249 = scmp.eq.s32.totalorder %s22, 1
      %p250 = scmp.ne.s32.totalorder %s245, %s247
      %p251 = scmp.eq.s32.totalorder %s22, 0
      %p252 = por %p250, %p251
      %p253 = scmp.ne.s32.totalorder %s245, %s247
      %p254 = scmp.eq.s32.totalorder %s27, 1
      %p255 = por %p253, %p254
      %p256 = scmp.ne.s32.totalorder %s247, %s248
      %p257 = scmp.eq.s32.totalorder %s27, 0
      %p258 = por %p256, %p257
      %p259 = scmp.ne.s32.totalorder %s247, %s248
      %p260 = scmp.eq.s32.totalorder %s28, 1
      %p261 = por %p259, %p260
      %p263 = scmp.ne.s32.totalorder %s248, %s262
      %p264 = scmp.eq.s32.totalorder %s28, 0
      %p265 = por %p263, %p264
      %s267 = sadd.s32 %s266, 1
      %p270 = scmp.eq.s32.totalorder %s22, 1
      %p271 = scmp.ne.s32.totalorder %s266, %s268
      %p272 = scmp.eq.s32.totalorder %s22, 0
      %p273 = por %p271, %p272
      %p274 = scmp.ne.s32.totalorder %s266, %s268
      %p275 = scmp.eq.s32.totalorder %s27, 1
      %p276 = por %p274, %p275
      %p277 = scmp.ne.s32.totalorder %s268, %s269
      %p278 = scmp.eq.s32.totalorder %s27, 0
      %p279 = por %p277, %p278
      %p280 = scmp.ne.s32.totalorder %s268, %s269
      %p281 = scmp.eq.s32.totalorder %s28, 1
      %p282 = por %p280, %p281
      %p284 = scmp.ne.s32.totalorder %s269, %s283
      %p285 = scmp.eq.s32.totalorder %s28, 0
      %p286 = por %p284, %p285
      %s287 = ssub.s32 %s22, %s29
      %p288 = scmp.eq.s32.totalorder %s287, 0
      %s290 = sadd.s32 %s289, 1
      %s291 = scalar_select %p288, %s289, %s290
      %p294 = pneg %p288
      %p295 = scmp.eq.s32.totalorder %s22, 1
      %p296 = por %p294, %p295
      %p297 = scmp.ne.s32.totalorder %s289, %s292
      %p298 = scmp.eq.s32.totalorder %s22, 0
      %p299 = por %p297, %p298
      %p300 = scmp.ne.s32.totalorder %s289, %s292
      %p301 = scmp.eq.s32.totalorder %s27, 1
      %p302 = por %p300, %p301
      %p303 = scmp.ne.s32.totalorder %s292, %s293
      %p304 = scmp.eq.s32.totalorder %s27, 0
      %p305 = por %p303, %p304
      %p306 = scmp.ne.s32.totalorder %s292, %s293
      %p307 = scmp.eq.s32.totalorder %s28, 1
      %p308 = por %p306, %p307
      %p310 = scmp.ne.s32.totalorder %s293, %s309
      %p311 = scmp.eq.s32.totalorder %s28, 0
      %p312 = por %p310, %p311
      %p313 = scmp.le.s32.totalorder 1, %s22
      %p314 = scmp.lt.s32.totalorder %s22, 3
      %p315 = pnand %p313, %p314
      %p316 = pneg %p315
      // Predicated region
      $region9: #{tpu_custom_call.1} parent=5 // pred_check
        _
      $region10: #{tpu_custom_call.1} parent=5 // pred_check_branch
        %318 = sbr.rel (%p315) target = $region12
      $region11: #{tpu_custom_call.1} parent=5 // pred_region
        %s319 = ssub.s32 %s22, 1
        // Predicated region
        $region13: #{tpu_custom_call.1} parent=11 // pred_check
          %p320 = pneg %p43
        $region14: #{tpu_custom_call.1} parent=11 // pred_check_branch
          %322 = sbr.rel (%p320) target = $region16
        $region15: #{tpu_custom_call.1} parent=11 // pred_region
          %s324 = ssub.s32 16, 16
          %325 = vsyncadd [#allocation4], %s324
          %s327 = sshll.u32 %s0, 4
          %s328 = int_to_ptr.vmem [resolvable:$true] %s327
          %330 = dma.vmem_to_smem %s328, 16, [#allocation2], [#allocation4]
        $region16: #{tpu_custom_call.1} parent=11 // pred_fallthru
          _
        // Predicated region
        $region17: #{tpu_custom_call.1} parent=11 // pred_check
          %p331 = pneg %p90
        $region18: #{tpu_custom_call.1} parent=11 // pred_check_branch
          %333 = sbr.rel (%p331) target = $region20
        $region19: #{tpu_custom_call.1} parent=11 // pred_region
          _
        $region20: #{tpu_custom_call.1} parent=11 // pred_fallthru
          _
        // Predicated region
        $region21: #{tpu_custom_call.1} parent=11 // pred_check
          %p334 = pneg %p111
        $region22: #{tpu_custom_call.1} parent=11 // pred_check_branch
          %336 = sbr.rel (%p334) target = $region24
        $region23: #{tpu_custom_call.1} parent=11 // pred_region
          _
        $region24: #{tpu_custom_call.1} parent=11 // pred_fallthru
          _
        // Predicated region
        $region25: #{tpu_custom_call.1} parent=11 // pred_check
          %p337 = pneg %p132
        $region26: #{tpu_custom_call.1} parent=11 // pred_check_branch
          %339 = sbr.rel (%p337) target = $region28
        $region27: #{tpu_custom_call.1} parent=11 // pred_region
          _
        $region28: #{tpu_custom_call.1} parent=11 // pred_fallthru
          _
        // Predicated region
        $region29: #{tpu_custom_call.1} parent=11 // pred_check
          %p340 = pneg %p153
        $region30: #{tpu_custom_call.1} parent=11 // pred_check_branch
          %342 = sbr.rel (%p340) target = $region32
        $region31: #{tpu_custom_call.1} parent=11 // pred_region
          _
        $region32: #{tpu_custom_call.1} parent=11 // pred_fallthru
          _
        // Predicated region
        $region33: #{tpu_custom_call.1} parent=11 // pred_check
          %p343 = pneg %p174
        $region34: #{tpu_custom_call.1} parent=11 // pred_check_branch
          %345 = sbr.rel (%p343) target = $region36
        $region35: #{tpu_custom_call.1} parent=11 // pred_region
          _
        $region36: #{tpu_custom_call.1} parent=11 // pred_fallthru
          _
        // Predicated region
        $region37: #{tpu_custom_call.1} parent=11 // pred_check
          %p346 = pneg %p195
        $region38: #{tpu_custom_call.1} parent=11 // pred_check_branch
          %348 = sbr.rel (%p346) target = $region40
        $region39: #{tpu_custom_call.1} parent=11 // pred_region
          _
        $region40: #{tpu_custom_call.1} parent=11 // pred_fallthru
          _
        // Predicated region
        $region41: #{tpu_custom_call.1} parent=11 // pred_check
          %p349 = pneg %p216
        $region42: #{tpu_custom_call.1} parent=11 // pred_check_branch
          %351 = sbr.rel (%p349) target = $region44
        $region43: #{tpu_custom_call.1} parent=11 // pred_region
          _
        $region44: #{tpu_custom_call.1} parent=11 // pred_fallthru
          _
        // Predicated region
        $region45: #{tpu_custom_call.1} parent=11 // pred_check
          %p352 = pneg %p237
        $region46: #{tpu_custom_call.1} parent=11 // pred_check_branch
          %354 = sbr.rel (%p352) target = $region48
        $region47: #{tpu_custom_call.1} parent=11 // pred_region
          _
        $region48: #{tpu_custom_call.1} parent=11 // pred_fallthru
          _
        // Predicated region
        $region49: #{tpu_custom_call.1} parent=11 // pred_check
          %p355 = pneg %p258
        $region50: #{tpu_custom_call.1} parent=11 // pred_check_branch
          %357 = sbr.rel (%p355) target = $region52
        $region51: #{tpu_custom_call.1} parent=11 // pred_region
          _
        $region52: #{tpu_custom_call.1} parent=11 // pred_fallthru
          _
        // Predicated region
        $region53: #{tpu_custom_call.1} parent=11 // pred_check
          %p358 = pneg %p279
        $region54: #{tpu_custom_call.1} parent=11 // pred_check_branch
          %360 = sbr.rel (%p358) target = $region56
        $region55: #{tpu_custom_call.1} parent=11 // pred_region
          _
        $region56: #{tpu_custom_call.1} parent=11 // pred_fallthru
          _
      $region12: #{tpu_custom_call.1} parent=5 // pred_fallthru
        _
      %p361 = scmp.lt.s32.totalorder %s22, 2
      // Predicated region
      $region57: #{tpu_custom_call.1} parent=5 // pred_check
        %p362 = pneg %p361
      $region58: #{tpu_custom_call.1} parent=5 // pred_check_branch
        %364 = sbr.rel (%p362) target = $region60
      $region59: #{tpu_custom_call.1} parent=5 // pred_region
        // Predicated region
        $region61: #{tpu_custom_call.1} parent=59 // pred_check
          %p365 = pneg %p63
        $region62: #{tpu_custom_call.1} parent=59 // pred_check_branch
          %367 = sbr.rel (%p365) target = $region64
        $region63: #{tpu_custom_call.1} parent=59 // pred_region
          %s368 = smul.u32 4, %s22
          %p369 = scmp.lt.s32.totalorder %s368, 7
          %s370 = scalar_select %p369, %s368, 7
          %s371 = smul.addr %s370, 4
          %s372 = scalar_lea.vmem %s1, %s371
          %s373 = smul.u32 4, %s22
        $region64: #{tpu_custom_call.1} parent=59 // pred_fallthru
          _
      $region60: #{tpu_custom_call.1} parent=5 // pred_fallthru
        _
      %p374 = scmp.le.s32.totalorder 1, %s22
      %p375 = scmp.lt.s32.totalorder %s22, 3
      %p376 = pnand %p374, %p375
      %p377 = pneg %p376
      // Predicated region
      $region65: #{tpu_custom_call.1} parent=5 // pred_check
        _
      $region66: #{tpu_custom_call.1} parent=5 // pred_check_branch
        %379 = sbr.rel (%p376) target = $region68
      $region67: #{tpu_custom_call.1} parent=5 // pred_region
        %s380 = ssub.s32 %s22, 1
        // Predicated region
        $region69: #{tpu_custom_call.1} parent=67 // pred_check
          %p381 = pneg %p43
        $region70: #{tpu_custom_call.1} parent=67 // pred_check_branch
          %383 = sbr.rel (%p381) target = $region72
        $region71: #{tpu_custom_call.1} parent=67 // pred_region
          %384 = dma.done [#allocation4], 16
        $region72: #{tpu_custom_call.1} parent=67 // pred_fallthru
          _
        %385 = sfence
        %p386 = pneg %p43
        %p387 = pneg %p40
        %s388 = smul.u32 4, %s27
        %p389 = scmp.lt.s32.totalorder %s388, 7
        %s390 = scalar_select %p389, %s388, 7
        %s391 = smul.addr %s390, 4
        %s392 = scalar_lea.vmem %s1, %s391
        %p393 = pneg %p69
        %p394 = pneg %p66
        %p395 = pneg %p90
        %p396 = pneg %p87
        %p397 = pneg %p111
        %p398 = pneg %p108
        %p399 = pneg %p132
        %p400 = pneg %p129
        %p401 = pneg %p153
        %p402 = pneg %p150
        %p403 = pneg %p174
        %p404 = pneg %p171
        %p405 = pneg %p195
        %p406 = pneg %p192
        %p407 = pneg %p216
        %p408 = pneg %p213
        %p409 = pneg %p237
        %p410 = pneg %p234
        %p411 = pneg %p258
        %p412 = pneg %p255
        %p413 = pneg %p279
        %p414 = pneg %p276
        %p415 = pneg %p305
        %p416 = pneg %p302
        %s417 = sand.u32 %s292, 1
        %s418 = scalar_lea.sflag [#allocation3], %s417
        %s419 = sand.u32 %s292, 1
        %s420 = smul.addr %s419, 16
        %s421 = scalar_lea.vmem [#allocation5], %s420
        %s422 = smul.u32 4, %s27
        %p423 = scmp.lt.s32.totalorder %s422, 7
        %s424 = scalar_select %p423, %s422, 7
        %s425 = smul.addr %s424, 4
        %s426 = scalar_lea.vmem %s1, %s425
        %s427 = smul.u32 4, %s27
        %s428 = smul.u32 4, %s27
        %v429 = vld [vmem:[%s426] ss:$4 sm:$0xf]
        %s430 = scalar_lea.vmem %s426, 1
        %v431 = vld [vmem:[%s430] ss:$4 sm:$0xf]
        %s432 = scalar_lea.vmem %s426, 2
        %v433 = vld [vmem:[%s432] ss:$4 sm:$0xf]
        %v434 = vld [vmem:[%s2] sm:$0x1f]
        %436 = vset.pattern.permute.xlu0 0
        %437 = vperm.xlu0 %436, %v434
        %v438 = vpop.permute.xlu0 %437
        %v441 = vlaneseq
        %v442 = vshrl.u32 %v441, 7
        %v443 = vsub.s32 0, %v442
        %v444 = vrot.slane %v429, %v443
        %v445 = vlaneseq
        %v446 = vshrl.u32 %v445, 7
        %v447 = vsub.s32 1, %v446
        %v448 = vrot.slane %v429, %v447
        %v449 = vlaneseq
        %v450 = vshrl.u32 %v449, 7
        %v451 = vsub.s32 2, %v450
        %v452 = vrot.slane %v429, %v451
        %v453 = vlaneseq
        %v454 = vshrl.u32 %v453, 7
        %v455 = vsub.s32 3, %v454
        %v456 = vrot.slane %v429, %v455
        %v461 = vmul.f32 %v438, %v444
        %v462 = vmul.f32 %v438, %v448
        %v463 = vmul.f32 %v438, %v452
        %v464 = vmul.f32 %v438, %v456
        %v465 = vld [vmem:[%s3] sm:$0x1f]
        %467 = vset.pattern.permute.xlu0 0
        %468 = vperm.xlu0 %467, %v465
        %v469 = vpop.permute.xlu0 %468
        %v471 = vadd.f32 %v461, %v469
        %v472 = vadd.f32 %v462, %v469
        %v473 = vadd.f32 %v463, %v469
        %v474 = vadd.f32 %v464, %v469
        %v475 = vmax.f32 %v471, 0.0
        %v476 = vmax.f32 %v472, 0.0
        %v477 = vmax.f32 %v473, 0.0
        %v478 = vmax.f32 %v474, 0.0
        %v479 = vld [vmem:[%s4] sm:$0xff]
        %v480 = vld [vmem:[%s4 + $0x8] sm:$0x3]
        %v481 = vld [vmem:[%s5] sm:$0xff]
        %v482 = vld [vmem:[%s5 + $0x8] sm:$0x3]
        %484 = vset.pattern.permute.xlu0 0
        %485 = vperm.xlu0 %484, %v481
        %v486 = vpop.permute.xlu0 %485
        %489 = vset.pattern.permute.xlu0 0
        %490 = vperm.xlu0 %489, %v482
        %v491 = vpop.permute.xlu0 %490
        %vm493 = vcmask 39936
        %v495 = vsel %vm493, %v479, 0
        %v498 = vsel %vm493, %v480, 0
        %vm500 = vcmask 1044480
        %v502 = vsel %vm500, %v475, 0
        %v505 = vsel %vm500, %v476, 0
        %v508 = vsel %vm500, %v477, 0
        %v511 = vsel %vm500, %v478, 0
        %513 = vmatprep.subr.mxu0 %v505
        %514 = vmatpush1.msra.mxu0 %v502
        %515 = vmatprep.subr.mxu0 0.0
        %516 = vmatpush1.msra.mxu0 0.0
        %517 = vmatprep.subr.mxu0 0.0
        %518 = vmatpush1.msra.mxu0 0.0
        %519 = vmatprep.subr.mxu0 0.0
        %520 = vmatpush1.msra.mxu0 0.0
        %521 = vmatprep.subr.mxu0 0.0
        %522 = vmatpush1.msra.mxu0 0.0
        %523 = vmatprep.subr.mxu0 0.0
        %524 = vmatpush1.msra.mxu0 0.0
        %525 = vmatprep.subr.mxu0 0.0
        %526 = vmatpush1.msra.mxu0 0.0
        %527 = vmatprep.subr.mxu0 0.0
        %528 = vmatpush1.msra.mxu0 0.0
        %529 = vmatprep.subr.mxu0 0.0
        %530 = vmatpush1.msra.mxu0 0.0
        %531 = vmatprep.subr.mxu0 0.0
        %532 = vmatpush1.msra.mxu0 0.0
        %533 = vmatprep.subr.mxu0 0.0
        %534 = vmatpush1.msra.mxu0 0.0
        %535 = vmatprep.subr.mxu0 0.0
        %536 = vmatpush1.msra.mxu0 0.0
        %537 = vmatprep.subr.mxu0 0.0
        %538 = vmatpush1.msra.mxu0 0.0
        %539 = vmatprep.subr.mxu0 0.0
        %540 = vmatpush1.msra.mxu0 0.0
        %541 = vmatprep.subr.mxu0 0.0
        %542 = vmatpush1.msra.mxu0 0.0
        %543 = vmatprep.subr.mxu0 0.0
        %544 = vmatpush1.msra.mxu0 0.0
        %545 = vmatprep.subr.mxu0 0.0
        %546 = vmatpush1.msra.mxu0 0.0
        %547 = vmatprep.subr.mxu0 0.0
        %548 = vmatpush1.msra.mxu0 0.0
        %549 = vmatprep.subr.mxu0 0.0
        %550 = vmatpush1.msra.mxu0 0.0
        %551 = vmatprep.subr.mxu0 0.0
        %552 = vmatpush1.msra.mxu0 0.0
        %553 = vmatprep.subr.mxu0 0.0
        %554 = vmatpush1.msra.mxu0 0.0
        %555 = vmatprep.subr.mxu0 0.0
        %556 = vmatpush1.msra.mxu0 0.0
        %557 = vmatprep.subr.mxu0 0.0
        %558 = vmatpush1.msra.mxu0 0.0
        %559 = vmatprep.subr.mxu0 0.0
        %560 = vmatpush1.msra.mxu0 0.0
        %561 = vmatprep.subr.mxu0 0.0
        %562 = vmatpush1.msra.mxu0 0.0
        %563 = vmatprep.subr.mxu0 0.0
        %564 = vmatpush1.msra.mxu0 0.0
        %565 = vmatprep.subr.mxu0 0.0
        %566 = vmatpush1.msra.mxu0 0.0
        %567 = vmatprep.subr.mxu0 0.0
        %568 = vmatpush1.msra.mxu0 0.0
        %569 = vmatprep.subr.mxu0 0.0
        %570 = vmatpush1.msra.mxu0 0.0
        %571 = vmatprep.subr.mxu0 0.0
        %572 = vmatpush1.msra.mxu0 0.0
        %573 = vmatprep.subr.mxu0 0.0
        %574 = vmatpush1.msra.mxu0 0.0
        %575 = vmatprep.subr.mxu0 0.0
        %576 = vmatpush1.msra.mxu0 0.0
        %577 = vmatprep.mubr.f32.mxu0 0.0
        %578 = vmatmul.mubr.f32.gmra.mrb[0].mxu0 %v495
        %v579 = vpop.f32.mrb[0].mxu0
        %v580 = vadd.f32 %v486, %v579
        %v581 = vpop.f32.mrb[0].mxu0
        %v582 = vadd.f32 %v486, %v581
        %583 = vmatprep.mubr.f32.mxu0 0.0
        %584 = vmatmul.mubr.f32.gmra.mrb[0].mxu0 %v498
        %v585 = vpop.f32.mrb[0].mxu0
        %v586 = vadd.f32 %v491, %v585
        %v587 = vpop.f32.mrb[0].mxu0
        %v588 = vadd.f32 %v491, %v587
        %589 = vdwg.mxu0
        %590 = vmatprep.subr.mxu0 %v511
        %591 = vmatpush1.msra.mxu0 %v508
        %592 = vmatprep.subr.mxu0 0.0
        %593 = vmatpush1.msra.mxu0 0.0
        %594 = vmatprep.subr.mxu0 0.0
        %595 = vmatpush1.msra.mxu0 0.0
        %596 = vmatprep.subr.mxu0 0.0
        %597 = vmatpush1.msra.mxu0 0.0
        %598 = vmatprep.subr.mxu0 0.0
        %599 = vmatpush1.msra.mxu0 0.0
        %600 = vmatprep.subr.mxu0 0.0
        %601 = vmatpush1.msra.mxu0 0.0
        %602 = vmatprep.subr.mxu0 0.0
        %603 = vmatpush1.msra.mxu0 0.0
        %604 = vmatprep.subr.mxu0 0.0
        %605 = vmatpush1.msra.mxu0 0.0
        %606 = vmatprep.subr.mxu0 0.0
        %607 = vmatpush1.msra.mxu0 0.0
        %608 = vmatprep.subr.mxu0 0.0
        %609 = vmatpush1.msra.mxu0 0.0
        %610 = vmatprep.subr.mxu0 0.0
        %611 = vmatpush1.msra.mxu0 0.0
        %612 = vmatprep.subr.mxu0 0.0
        %613 = vmatpush1.msra.mxu0 0.0
        %614 = vmatprep.subr.mxu0 0.0
        %615 = vmatpush1.msra.mxu0 0.0
        %616 = vmatprep.subr.mxu0 0.0
        %617 = vmatpush1.msra.mxu0 0.0
        %618 = vmatprep.subr.mxu0 0.0
        %619 = vmatpush1.msra.mxu0 0.0
        %620 = vmatprep.subr.mxu0 0.0
        %621 = vmatpush1.msra.mxu0 0.0
        %622 = vmatprep.subr.mxu0 0.0
        %623 = vmatpush1.msra.mxu0 0.0
        %624 = vmatprep.subr.mxu0 0.0
        %625 = vmatpush1.msra.mxu0 0.0
        %626 = vmatprep.subr.mxu0 0.0
        %627 = vmatpush1.msra.mxu0 0.0
        %628 = vmatprep.subr.mxu0 0.0
        %629 = vmatpush1.msra.mxu0 0.0
        %630 = vmatprep.subr.mxu0 0.0
        %631 = vmatpush1.msra.mxu0 0.0
        %632 = vmatprep.subr.mxu0 0.0
        %633 = vmatpush1.msra.mxu0 0.0
        %634 = vmatprep.subr.mxu0 0.0
        %635 = vmatpush1.msra.mxu0 0.0
        %636 = vmatprep.subr.mxu0 0.0
        %637 = vmatpush1.msra.mxu0 0.0
        %638 = vmatprep.subr.mxu0 0.0
        %639 = vmatpush1.msra.mxu0 0.0
        %640 = vmatprep.subr.mxu0 0.0
        %641 = vmatpush1.msra.mxu0 0.0
        %642 = vmatprep.subr.mxu0 0.0
        %643 = vmatpush1.msra.mxu0 0.0
        %644 = vmatprep.subr.mxu0 0.0
        %645 = vmatpush1.msra.mxu0 0.0
        %646 = vmatprep.subr.mxu0 0.0
        %647 = vmatpush1.msra.mxu0 0.0
        %648 = vmatprep.subr.mxu0 0.0
        %649 = vmatpush1.msra.mxu0 0.0
        %650 = vmatprep.subr.mxu0 0.0
        %651 = vmatpush1.msra.mxu0 0.0
        %652 = vmatprep.subr.mxu0 0.0
        %653 = vmatpush1.msra.mxu0 0.0
        %654 = vmatprep.mubr.f32.mxu0 0.0
        %655 = vmatmul.mubr.f32.gmra.mrb[0].mxu0 %v495
        %v656 = vpop.f32.mrb[0].mxu0
        %v657 = vadd.f32 %v486, %v656
        %v658 = vpop.f32.mrb[0].mxu0
        %v659 = vadd.f32 %v486, %v658
        %660 = vmatprep.mubr.f32.mxu0 0.0
        %661 = vmatmul.mubr.f32.gmra.mrb[0].mxu0 %v498
        %v662 = vpop.f32.mrb[0].mxu0
        %v663 = vadd.f32 %v491, %v662
        %v664 = vpop.f32.mrb[0].mxu0
        %v665 = vadd.f32 %v491, %v664
        %666 = vdwg.mxu0
        %v667 = vmax.f32 %v580, 0.0
        %v668 = vmax.f32 %v582, 0.0
        %v669 = vmax.f32 %v657, 0.0
        %v670 = vmax.f32 %v659, 0.0
        %v671 = vmax.f32 %v586, 0.0
        %v672 = vmax.f32 %v588, 0.0
        %v673 = vmax.f32 %v663, 0.0
        %v674 = vmax.f32 %v665, 0.0
        %v675 = vld [vmem:[%s6] sm:$0xff]
        %v676 = vld [vmem:[%s6 + $0x8] sm:$0xff]
        %v677 = vld [vmem:[%s6 + $0x10] sm:$0xf]
        %v678 = vld [vmem:[%s7] sm:$0xff]
        %v679 = vld [vmem:[%s7 + $0x8] sm:$0xff]
        %v680 = vld [vmem:[%s7 + $0x10] sm:$0xf]
        %682 = vset.pattern.permute.xlu0 0
        %683 = vperm.xlu0 %682, %v678
        %v684 = vpop.permute.xlu0 %683
        %687 = vset.pattern.permute.xlu0 0
        %688 = vperm.xlu0 %687, %v679
        %v689 = vpop.permute.xlu0 %688
        %692 = vset.pattern.permute.xlu0 0
        %693 = vperm.xlu0 %692, %v680
        %v694 = vpop.permute.xlu0 %693
        %vm696 = vcmask 80896
        %v698 = vsel %vm696, %v675, 0
        %v701 = vsel %vm696, %v676, 0
        %v704 = vsel %vm696, %v677, 0
        %vm706 = vcmask 1041408
        %v708 = vsel %vm706, %v671, 0
        %v711 = vsel %vm706, %v672, 0
        %v714 = vsel %vm706, %v673, 0
        %v717 = vsel %vm706, %v674, 0
        %719 = vmatprep.subr.mxu0 %v668
        %720 = vmatpush1.msra.mxu0 %v667
        %721 = vmatprep.subr.mxu0 %v711
        %722 = vmatpush1.msra.mxu0 %v708
        %723 = vmatprep.subr.mxu0 0.0
        %724 = vmatpush1.msra.mxu0 0.0
        %725 = vmatprep.subr.mxu0 0.0
        %726 = vmatpush1.msra.mxu0 0.0
        %727 = vmatprep.subr.mxu0 0.0
        %728 = vmatpush1.msra.mxu0 0.0
        %729 = vmatprep.subr.mxu0 0.0
        %730 = vmatpush1.msra.mxu0 0.0
        %731 = vmatprep.subr.mxu0 0.0
        %732 = vmatpush1.msra.mxu0 0.0
        %733 = vmatprep.subr.mxu0 0.0
        %734 = vmatpush1.msra.mxu0 0.0
        %735 = vmatprep.subr.mxu0 0.0
        %736 = vmatpush1.msra.mxu0 0.0
        %737 = vmatprep.subr.mxu0 0.0
        %738 = vmatpush1.msra.mxu0 0.0
        %739 = vmatprep.subr.mxu0 0.0
        %740 = vmatpush1.msra.mxu0 0.0
        %741 = vmatprep.subr.mxu0 0.0
        %742 = vmatpush1.msra.mxu0 0.0
        %743 = vmatprep.subr.mxu0 0.0
        %744 = vmatpush1.msra.mxu0 0.0
        %745 = vmatprep.subr.mxu0 0.0
        %746 = vmatpush1.msra.mxu0 0.0
        %747 = vmatprep.subr.mxu0 0.0
        %748 = vmatpush1.msra.mxu0 0.0
        %749 = vmatprep.subr.mxu0 0.0
        %750 = vmatpush1.msra.mxu0 0.0
        %751 = vmatprep.subr.mxu0 0.0
        %752 = vmatpush1.msra.mxu0 0.0
        %753 = vmatprep.subr.mxu0 0.0
        %754 = vmatpush1.msra.mxu0 0.0
        %755 = vmatprep.subr.mxu0 0.0
        %756 = vmatpush1.msra.mxu0 0.0
        %757 = vmatprep.subr.mxu0 0.0
        %758 = vmatpush1.msra.mxu0 0.0
        %759 = vmatprep.subr.mxu0 0.0
        %760 = vmatpush1.msra.mxu0 0.0
        %761 = vmatprep.subr.mxu0 0.0
        %762 = vmatpush1.msra.mxu0 0.0
        %763 = vmatprep.subr.mxu0 0.0
        %764 = vmatpush1.msra.mxu0 0.0
        %765 = vmatprep.subr.mxu0 0.0
        %766 = vmatpush1.msra.mxu0 0.0
        %767 = vmatprep.subr.mxu0 0.0
        %768 = vmatpush1.msra.mxu0 0.0
        %769 = vmatprep.subr.mxu0 0.0
        %770 = vmatpush1.msra.mxu0 0.0
        %771 = vmatprep.subr.mxu0 0.0
        %772 = vmatpush1.msra.mxu0 0.0
        %773 = vmatprep.subr.mxu0 0.0
        %774 = vmatpush1.msra.mxu0 0.0
        %775 = vmatprep.subr.mxu0 0.0
        %776 = vmatpush1.msra.mxu0 0.0
        %777 = vmatprep.subr.mxu0 0.0
        %778 = vmatpush1.msra.mxu0 0.0
        %779 = vmatprep.subr.mxu0 0.0
        %780 = vmatpush1.msra.mxu0 0.0
        %781 = vmatprep.subr.mxu0 0.0
        %782 = vmatpush1.msra.mxu0 0.0
        %783 = vmatprep.mubr.f32.mxu0 0.0
        %784 = vmatmul.mubr.f32.gmra.mrb[0].mxu0 %v698
        %v785 = vpop.f32.mrb[0].mxu0
        %v786 = vadd.f32 %v684, %v785
        %v787 = vpop.f32.mrb[0].mxu0
        %v788 = vadd.f32 %v684, %v787
        %789 = vmatprep.mubr.f32.mxu0 0.0
        %790 = vmatmul.mubr.f32.gmra.mrb[0].mxu0 %v701
        %v791 = vpop.f32.mrb[0].mxu0
        %v792 = vadd.f32 %v689, %v791
        %v793 = vpop.f32.mrb[0].mxu0
        %v794 = vadd.f32 %v689, %v793
        %795 = vmatprep.mubr.f32.mxu0 0.0
        %796 = vmatmul.mubr.f32.gmra.mrb[0].mxu0 %v704
        %v797 = vpop.f32.mrb[0].mxu0
        %v798 = vadd.f32 %v694, %v797
        %v799 = vpop.f32.mrb[0].mxu0
        %v800 = vadd.f32 %v694, %v799
        %801 = vdwg.mxu0
        %802 = vmatprep.subr.mxu0 %v670
        %803 = vmatpush1.msra.mxu0 %v669
        %804 = vmatprep.subr.mxu0 %v717
        %805 = vmatpush1.msra.mxu0 %v714
        %806 = vmatprep.subr.mxu0 0.0
        %807 = vmatpush1.msra.mxu0 0.0
        %808 = vmatprep.subr.mxu0 0.0
        %809 = vmatpush1.msra.mxu0 0.0
        %810 = vmatprep.subr.mxu0 0.0
        %811 = vmatpush1.msra.mxu0 0.0
        %812 = vmatprep.subr.mxu0 0.0
        %813 = vmatpush1.msra.mxu0 0.0
        %814 = vmatprep.subr.mxu0 0.0
        %815 = vmatpush1.msra.mxu0 0.0
        %816 = vmatprep.subr.mxu0 0.0
        %817 = vmatpush1.msra.mxu0 0.0
        %818 = vmatprep.subr.mxu0 0.0
        %819 = vmatpush1.msra.mxu0 0.0
        %820 = vmatprep.subr.mxu0 0.0
        %821 = vmatpush1.msra.mxu0 0.0
        %822 = vmatprep.subr.mxu0 0.0
        %823 = vmatpush1.msra.mxu0 0.0
        %824 = vmatprep.subr.mxu0 0.0
        %825 = vmatpush1.msra.mxu0 0.0
        %826 = vmatprep.subr.mxu0 0.0
        %827 = vmatpush1.msra.mxu0 0.0
        %828 = vmatprep.subr.mxu0 0.0
        %829 = vmatpush1.msra.mxu0 0.0
        %830 = vmatprep.subr.mxu0 0.0
        %831 = vmatpush1.msra.mxu0 0.0
        %832 = vmatprep.subr.mxu0 0.0
        %833 = vmatpush1.msra.mxu0 0.0
        %834 = vmatprep.subr.mxu0 0.0
        %835 = vmatpush1.msra.mxu0 0.0
        %836 = vmatprep.subr.mxu0 0.0
        %837 = vmatpush1.msra.mxu0 0.0
        %838 = vmatprep.subr.mxu0 0.0
        %839 = vmatpush1.msra.mxu0 0.0
        %840 = vmatprep.subr.mxu0 0.0
        %841 = vmatpush1.msra.mxu0 0.0
        %842 = vmatprep.subr.mxu0 0.0
        %843 = vmatpush1.msra.mxu0 0.0
        %844 = vmatprep.subr.mxu0 0.0
        %845 = vmatpush1.msra.mxu0 0.0
        %846 = vmatprep.subr.mxu0 0.0
        %847 = vmatpush1.msra.mxu0 0.0
        %848 = vmatprep.subr.mxu0 0.0
        %849 = vmatpush1.msra.mxu0 0.0
        %850 = vmatprep.subr.mxu0 0.0
        %851 = vmatpush1.msra.mxu0 0.0
        %852 = vmatprep.subr.mxu0 0.0
        %853 = vmatpush1.msra.mxu0 0.0
        %854 = vmatprep.subr.mxu0 0.0
        %855 = vmatpush1.msra.mxu0 0.0
        %856 = vmatprep.subr.mxu0 0.0
        %857 = vmatpush1.msra.mxu0 0.0
        %858 = vmatprep.subr.mxu0 0.0
        %859 = vmatpush1.msra.mxu0 0.0
        %860 = vmatprep.subr.mxu0 0.0
        %861 = vmatpush1.msra.mxu0 0.0
        %862 = vmatprep.subr.mxu0 0.0
        %863 = vmatpush1.msra.mxu0 0.0
        %864 = vmatprep.subr.mxu0 0.0
        %865 = vmatpush1.msra.mxu0 0.0
        %866 = vmatprep.mubr.f32.mxu0 0.0
        %867 = vmatmul.mubr.f32.gmra.mrb[0].mxu0 %v698
        %v868 = vpop.f32.mrb[0].mxu0
        %v869 = vadd.f32 %v684, %v868
        %v870 = vpop.f32.mrb[0].mxu0
        %v871 = vadd.f32 %v684, %v870
        %872 = vmatprep.mubr.f32.mxu0 0.0
        %873 = vmatmul.mubr.f32.gmra.mrb[0].mxu0 %v701
        %v874 = vpop.f32.mrb[0].mxu0
        %v875 = vadd.f32 %v689, %v874
        %v876 = vpop.f32.mrb[0].mxu0
        %v877 = vadd.f32 %v689, %v876
        %878 = vmatprep.mubr.f32.mxu0 0.0
        %879 = vmatmul.mubr.f32.gmra.mrb[0].mxu0 %v704
        %v880 = vpop.f32.mrb[0].mxu0
        %v881 = vadd.f32 %v694, %v880
        %v882 = vpop.f32.mrb[0].mxu0
        %v883 = vadd.f32 %v694, %v882
        %884 = vdwg.mxu0
        %v885 = vmax.f32 %v786, 0.0
        %v886 = vmax.f32 %v788, 0.0
        %v887 = vmax.f32 %v869, 0.0
        %v888 = vmax.f32 %v871, 0.0
        %v889 = vmax.f32 %v792, 0.0
        %v890 = vmax.f32 %v794, 0.0
        %v891 = vmax.f32 %v875, 0.0
        %v892 = vmax.f32 %v877, 0.0
        %v893 = vmax.f32 %v798, 0.0
        %v894 = vmax.f32 %v800, 0.0
        %v895 = vmax.f32 %v881, 0.0
        %v896 = vmax.f32 %v883, 0.0
        %v897 = vld [vmem:[%s8] sm:$0x1f]
        %v898 = vld [vmem:[%s9] sm:$0x1f]
        %900 = vset.pattern.permute.xlu0 0
        %901 = vperm.xlu0 %900, %v898
        %v902 = vpop.permute.xlu0 %901
        %vm904 = vcmask 162816
        %v906 = vsel %vm904, %v897, 0
        %vm908 = vcmask 1043456
        %v910 = vsel %vm908, %v893, 0
        %v913 = vsel %vm908, %v894, 0
        %v916 = vsel %vm908, %v895, 0
        %v919 = vsel %vm908, %v896, 0
        %921 = vmatprep.subr.mxu0 %v886
        %922 = vmatpush1.msra.mxu0 %v885
        %923 = vmatprep.subr.mxu0 %v890
        %924 = vmatpush1.msra.mxu0 %v889
        %925 = vmatprep.subr.mxu0 %v913
        %926 = vmatpush1.msra.mxu0 %v910
        %927 = vmatprep.subr.mxu0 0.0
        %928 = vmatpush1.msra.mxu0 0.0
        %929 = vmatprep.subr.mxu0 0.0
        %930 = vmatpush1.msra.mxu0 0.0
        %931 = vmatprep.subr.mxu0 0.0
        %932 = vmatpush1.msra.mxu0 0.0
        %933 = vmatprep.subr.mxu0 0.0
        %934 = vmatpush1.msra.mxu0 0.0
        %935 = vmatprep.subr.mxu0 0.0
        %936 = vmatpush1.msra.mxu0 0.0
        %937 = vmatprep.subr.mxu0 0.0
        %938 = vmatpush1.msra.mxu0 0.0
        %939 = vmatprep.subr.mxu0 0.0
        %940 = vmatpush1.msra.mxu0 0.0
        %941 = vmatprep.subr.mxu0 0.0
        %942 = vmatpush1.msra.mxu0 0.0
        %943 = vmatprep.subr.mxu0 0.0
        %944 = vmatpush1.msra.mxu0 0.0
        %945 = vmatprep.subr.mxu0 0.0
        %946 = vmatpush1.msra.mxu0 0.0
        %947 = vmatprep.subr.mxu0 0.0
        %948 = vmatpush1.msra.mxu0 0.0
        %949 = vmatprep.subr.mxu0 0.0
        %950 = vmatpush1.msra.mxu0 0.0
        %951 = vmatprep.subr.mxu0 0.0
        %952 = vmatpush1.msra.mxu0 0.0
        %953 = vmatprep.subr.mxu0 0.0
        %954 = vmatpush1.msra.mxu0 0.0
        %955 = vmatprep.subr.mxu0 0.0
        %956 = vmatpush1.msra.mxu0 0.0
        %957 = vmatprep.subr.mxu0 0.0
        %958 = vmatpush1.msra.mxu0 0.0
        %959 = vmatprep.subr.mxu0 0.0
        %960 = vmatpush1.msra.mxu0 0.0
        %961 = vmatprep.subr.mxu0 0.0
        %962 = vmatpush1.msra.mxu0 0.0
        %963 = vmatprep.subr.mxu0 0.0
        %964 = vmatpush1.msra.mxu0 0.0
        %965 = vmatprep.subr.mxu0 0.0
        %966 = vmatpush1.msra.mxu0 0.0
        %967 = vmatprep.subr.mxu0 0.0
        %968 = vmatpush1.msra.mxu0 0.0
        %969 = vmatprep.subr.mxu0 0.0
        %970 = vmatpush1.msra.mxu0 0.0
        %971 = vmatprep.subr.mxu0 0.0
        %972 = vmatpush1.msra.mxu0 0.0
        %973 = vmatprep.subr.mxu0 0.0
        %974 = vmatpush1.msra.mxu0 0.0
        %975 = vmatprep.subr.mxu0 0.0
        %976 = vmatpush1.msra.mxu0 0.0
        %977 = vmatprep.subr.mxu0 0.0
        %978 = vmatpush1.msra.mxu0 0.0
        %979 = vmatprep.subr.mxu0 0.0
        %980 = vmatpush1.msra.mxu0 0.0
        %981 = vmatprep.subr.mxu0 0.0
        %982 = vmatpush1.msra.mxu0 0.0
        %983 = vmatprep.subr.mxu0 0.0
        %984 = vmatpush1.msra.mxu0 0.0
        %985 = vmatprep.mubr.f32.mxu0 0.0
        %986 = vmatmul.mubr.f32.gmra.mrb[0].mxu0 %v906
        %v987 = vpop.f32.mrb[0].mxu0
        %v988 = vadd.f32 %v902, %v987
        %v989 = vpop.f32.mrb[0].mxu0
        %v990 = vadd.f32 %v902, %v989
        %991 = vdwg.mxu0
        %992 = vmatprep.subr.mxu0 %v888
        %993 = vmatpush1.msra.mxu0 %v887
        %994 = vmatprep.subr.mxu0 %v892
        %995 = vmatpush1.msra.mxu0 %v891
        %996 = vmatprep.subr.mxu0 %v919
        %997 = vmatpush1.msra.mxu0 %v916
        %998 = vmatprep.subr.mxu0 0.0
        %999 = vmatpush1.msra.mxu0 0.0
        %1000 = vmatprep.subr.mxu0 0.0
        %1001 = vmatpush1.msra.mxu0 0.0
        %1002 = vmatprep.subr.mxu0 0.0
        %1003 = vmatpush1.msra.mxu0 0.0
        %1004 = vmatprep.subr.mxu0 0.0
        %1005 = vmatpush1.msra.mxu0 0.0
        %1006 = vmatprep.subr.mxu0 0.0
        %1007 = vmatpush1.msra.mxu0 0.0
        %1008 = vmatprep.subr.mxu0 0.0
        %1009 = vmatpush1.msra.mxu0 0.0
        %1010 = vmatprep.subr.mxu0 0.0
        %1011 = vmatpush1.msra.mxu0 0.0
        %1012 = vmatprep.subr.mxu0 0.0
        %1013 = vmatpush1.msra.mxu0 0.0
        %1014 = vmatprep.subr.mxu0 0.0
        %1015 = vmatpush1.msra.mxu0 0.0
        %1016 = vmatprep.subr.mxu0 0.0
        %1017 = vmatpush1.msra.mxu0 0.0
        %1018 = vmatprep.subr.mxu0 0.0
        %1019 = vmatpush1.msra.mxu0 0.0
        %1020 = vmatprep.subr.mxu0 0.0
        %1021 = vmatpush1.msra.mxu0 0.0
        %1022 = vmatprep.subr.mxu0 0.0
        %1023 = vmatpush1.msra.mxu0 0.0
        %1024 = vmatprep.subr.mxu0 0.0
        %1025 = vmatpush1.msra.mxu0 0.0
        %1026 = vmatprep.subr.mxu0 0.0
        %1027 = vmatpush1.msra.mxu0 0.0
        %1028 = vmatprep.subr.mxu0 0.0
        %1029 = vmatpush1.msra.mxu0 0.0
        %1030 = vmatprep.subr.mxu0 0.0
        %1031 = vmatpush1.msra.mxu0 0.0
        %1032 = vmatprep.subr.mxu0 0.0
        %1033 = vmatpush1.msra.mxu0 0.0
        %1034 = vmatprep.subr.mxu0 0.0
        %1035 = vmatpush1.msra.mxu0 0.0
        %1036 = vmatprep.subr.mxu0 0.0
        %1037 = vmatpush1.msra.mxu0 0.0
        %1038 = vmatprep.subr.mxu0 0.0
        %1039 = vmatpush1.msra.mxu0 0.0
        %1040 = vmatprep.subr.mxu0 0.0
        %1041 = vmatpush1.msra.mxu0 0.0
        %1042 = vmatprep.subr.mxu0 0.0
        %1043 = vmatpush1.msra.mxu0 0.0
        %1044 = vmatprep.subr.mxu0 0.0
        %1045 = vmatpush1.msra.mxu0 0.0
        %1046 = vmatprep.subr.mxu0 0.0
        %1047 = vmatpush1.msra.mxu0 0.0
        %1048 = vmatprep.subr.mxu0 0.0
        %1049 = vmatpush1.msra.mxu0 0.0
        %1050 = vmatprep.subr.mxu0 0.0
        %1051 = vmatpush1.msra.mxu0 0.0
        %1052 = vmatprep.subr.mxu0 0.0
        %1053 = vmatpush1.msra.mxu0 0.0
        %1054 = vmatprep.subr.mxu0 0.0
        %1055 = vmatpush1.msra.mxu0 0.0
        %1056 = vmatprep.mubr.f32.mxu0 0.0
        %1057 = vmatmul.mubr.f32.gmra.mrb[0].mxu0 %v906
        %v1058 = vpop.f32.mrb[0].mxu0
        %v1059 = vadd.f32 %v902, %v1058
        %v1060 = vpop.f32.mrb[0].mxu0
        %v1061 = vadd.f32 %v902, %v1060
        %1062 = vdwg.mxu0
        %v1063 = vmax.f32 %v988, 0.0
        %v1064 = vmax.f32 %v990, 0.0
        %v1065 = vmax.f32 %v1059, 0.0
        %v1066 = vmax.f32 %v1061, 0.0
        %v1067 = vld [vmem:[%s10] sm:$0xff]
        %v1068 = vld [vmem:[%s10 + $0x8] sm:$0x1]
        %v1069 = vld [vmem:[%s11] sm:$0xff]
        %v1070 = vld [vmem:[%s11 + $0x8] sm:$0x1]
        %1072 = vset.pattern.permute.xlu0 0
        %1073 = vperm.xlu0 %1072, %v1069
        %v1074 = vpop.permute.xlu0 %1073
        %1077 = vset.pattern.permute.xlu0 0
        %1078 = vperm.xlu0 %1077, %v1070
        %v1079 = vpop.permute.xlu0 %1078
        %v1082 = vsel %vm493, %v1067, 0
        %v1085 = vsel %vm493, %v1068, 0
        %v1088 = vsel %vm500, %v1063, 0
        %v1091 = vsel %vm500, %v1064, 0
        %v1094 = vsel %vm500, %v1065, 0
        %v1097 = vsel %vm500, %v1066, 0
        %1099 = vmatprep.subr.mxu0 %v1091
        %1100 = vmatpush1.msra.mxu0 %v1088
        %1101 = vmatprep.subr.mxu0 0.0
        %1102 = vmatpush1.msra.mxu0 0.0
        %1103 = vmatprep.subr.mxu0 0.0
        %1104 = vmatpush1.msra.mxu0 0.0
        %1105 = vmatprep.subr.mxu0 0.0
        %1106 = vmatpush1.msra.mxu0 0.0
        %1107 = vmatprep.subr.mxu0 0.0
        %1108 = vmatpush1.msra.mxu0 0.0
        %1109 = vmatprep.subr.mxu0 0.0
        %1110 = vmatpush1.msra.mxu0 0.0
        %1111 = vmatprep.subr.mxu0 0.0
        %1112 = vmatpush1.msra.mxu0 0.0
        %1113 = vmatprep.subr.mxu0 0.0
        %1114 = vmatpush1.msra.mxu0 0.0
        %1115 = vmatprep.subr.mxu0 0.0
        %1116 = vmatpush1.msra.mxu0 0.0
        %1117 = vmatprep.subr.mxu0 0.0
        %1118 = vmatpush1.msra.mxu0 0.0
        %1119 = vmatprep.subr.mxu0 0.0
        %1120 = vmatpush1.msra.mxu0 0.0
        %1121 = vmatprep.subr.mxu0 0.0
        %1122 = vmatpush1.msra.mxu0 0.0
        %1123 = vmatprep.subr.mxu0 0.0
        %1124 = vmatpush1.msra.mxu0 0.0
        %1125 = vmatprep.subr.mxu0 0.0
        %1126 = vmatpush1.msra.mxu0 0.0
        %1127 = vmatprep.subr.mxu0 0.0
        %1128 = vmatpush1.msra.mxu0 0.0
        %1129 = vmatprep.subr.mxu0 0.0
        %1130 = vmatpush1.msra.mxu0 0.0
        %1131 = vmatprep.subr.mxu0 0.0
        %1132 = vmatpush1.msra.mxu0 0.0
        %1133 = vmatprep.subr.mxu0 0.0
        %1134 = vmatpush1.msra.mxu0 0.0
        %1135 = vmatprep.subr.mxu0 0.0
        %1136 = vmatpush1.msra.mxu0 0.0
        %1137 = vmatprep.subr.mxu0 0.0
        %1138 = vmatpush1.msra.mxu0 0.0
        %1139 = vmatprep.subr.mxu0 0.0
        %1140 = vmatpush1.msra.mxu0 0.0
        %1141 = vmatprep.subr.mxu0 0.0
        %1142 = vmatpush1.msra.mxu0 0.0
        %1143 = vmatprep.subr.mxu0 0.0
        %1144 = vmatpush1.msra.mxu0 0.0
        %1145 = vmatprep.subr.mxu0 0.0
        %1146 = vmatpush1.msra.mxu0 0.0
        %1147 = vmatprep.subr.mxu0 0.0
        %1148 = vmatpush1.msra.mxu0 0.0
        %1149 = vmatprep.subr.mxu0 0.0
        %1150 = vmatpush1.msra.mxu0 0.0
        %1151 = vmatprep.subr.mxu0 0.0
        %1152 = vmatpush1.msra.mxu0 0.0
        %1153 = vmatprep.subr.mxu0 0.0
        %1154 = vmatpush1.msra.mxu0 0.0
        %1155 = vmatprep.subr.mxu0 0.0
        %1156 = vmatpush1.msra.mxu0 0.0
        %1157 = vmatprep.subr.mxu0 0.0
        %1158 = vmatpush1.msra.mxu0 0.0
        %1159 = vmatprep.subr.mxu0 0.0
        %1160 = vmatpush1.msra.mxu0 0.0
        %1161 = vmatprep.subr.mxu0 0.0
        %1162 = vmatpush1.msra.mxu0 0.0
        %1163 = vmatprep.mubr.f32.mxu0 0.0
        %1164 = vmatmul.mubr.f32.gmra.mrb[0].mxu0 %v1082
        %v1165 = vpop.f32.mrb[0].mxu0
        %v1166 = vadd.f32 %v1074, %v1165
        %v1167 = vpop.f32.mrb[0].mxu0
        %v1168 = vadd.f32 %v1074, %v1167
        %1169 = vmatprep.mubr.f32.mxu0 0.0
        %1170 = vmatmul.mubr.f32.gmra.mrb[0].mxu0 %v1085
        %v1171 = vpop.f32.mrb[0].mxu0
        %v1172 = vadd.f32 %v1079, %v1171
        %v1173 = vpop.f32.mrb[0].mxu0
        %v1174 = vadd.f32 %v1079, %v1173
        %1175 = vdwg.mxu0
        %1176 = vmatprep.subr.mxu0 %v1097
        %1177 = vmatpush1.msra.mxu0 %v1094
        %1178 = vmatprep.subr.mxu0 0.0
        %1179 = vmatpush1.msra.mxu0 0.0
        %1180 = vmatprep.subr.mxu0 0.0
        %1181 = vmatpush1.msra.mxu0 0.0
        %1182 = vmatprep.subr.mxu0 0.0
        %1183 = vmatpush1.msra.mxu0 0.0
        %1184 = vmatprep.subr.mxu0 0.0
        %1185 = vmatpush1.msra.mxu0 0.0
        %1186 = vmatprep.subr.mxu0 0.0
        %1187 = vmatpush1.msra.mxu0 0.0
        %1188 = vmatprep.subr.mxu0 0.0
        %1189 = vmatpush1.msra.mxu0 0.0
        %1190 = vmatprep.subr.mxu0 0.0
        %1191 = vmatpush1.msra.mxu0 0.0
        %1192 = vmatprep.subr.mxu0 0.0
        %1193 = vmatpush1.msra.mxu0 0.0
        %1194 = vmatprep.subr.mxu0 0.0
        %1195 = vmatpush1.msra.mxu0 0.0
        %1196 = vmatprep.subr.mxu0 0.0
        %1197 = vmatpush1.msra.mxu0 0.0
        %1198 = vmatprep.subr.mxu0 0.0
        %1199 = vmatpush1.msra.mxu0 0.0
        %1200 = vmatprep.subr.mxu0 0.0
        %1201 = vmatpush1.msra.mxu0 0.0
        %1202 = vmatprep.subr.mxu0 0.0
        %1203 = vmatpush1.msra.mxu0 0.0
        %1204 = vmatprep.subr.mxu0 0.0
        %1205 = vmatpush1.msra.mxu0 0.0
        %1206 = vmatprep.subr.mxu0 0.0
        %1207 = vmatpush1.msra.mxu0 0.0
        %1208 = vmatprep.subr.mxu0 0.0
        %1209 = vmatpush1.msra.mxu0 0.0
        %1210 = vmatprep.subr.mxu0 0.0
        %1211 = vmatpush1.msra.mxu0 0.0
        %1212 = vmatprep.subr.mxu0 0.0
        %1213 = vmatpush1.msra.mxu0 0.0
        %1214 = vmatprep.subr.mxu0 0.0
        %1215 = vmatpush1.msra.mxu0 0.0
        %1216 = vmatprep.subr.mxu0 0.0
        %1217 = vmatpush1.msra.mxu0 0.0
        %1218 = vmatprep.subr.mxu0 0.0
        %1219 = vmatpush1.msra.mxu0 0.0
        %1220 = vmatprep.subr.mxu0 0.0
        %1221 = vmatpush1.msra.mxu0 0.0
        %1222 = vmatprep.subr.mxu0 0.0
        %1223 = vmatpush1.msra.mxu0 0.0
        %1224 = vmatprep.subr.mxu0 0.0
        %1225 = vmatpush1.msra.mxu0 0.0
        %1226 = vmatprep.subr.mxu0 0.0
        %1227 = vmatpush1.msra.mxu0 0.0
        %1228 = vmatprep.subr.mxu0 0.0
        %1229 = vmatpush1.msra.mxu0 0.0
        %1230 = vmatprep.subr.mxu0 0.0
        %1231 = vmatpush1.msra.mxu0 0.0
        %1232 = vmatprep.subr.mxu0 0.0
        %1233 = vmatpush1.msra.mxu0 0.0
        %1234 = vmatprep.subr.mxu0 0.0
        %1235 = vmatpush1.msra.mxu0 0.0
        %1236 = vmatprep.subr.mxu0 0.0
        %1237 = vmatpush1.msra.mxu0 0.0
        %1238 = vmatprep.subr.mxu0 0.0
        %1239 = vmatpush1.msra.mxu0 0.0
        %1240 = vmatprep.mubr.f32.mxu0 0.0
        %1241 = vmatmul.mubr.f32.gmra.mrb[0].mxu0 %v1082
        %v1242 = vpop.f32.mrb[0].mxu0
        %v1243 = vadd.f32 %v1074, %v1242
        %v1244 = vpop.f32.mrb[0].mxu0
        %v1245 = vadd.f32 %v1074, %v1244
        %1246 = vmatprep.mubr.f32.mxu0 0.0
        %1247 = vmatmul.mubr.f32.gmra.mrb[0].mxu0 %v1085
        %v1248 = vpop.f32.mrb[0].mxu0
        %v1249 = vadd.f32 %v1079, %v1248
        %v1250 = vpop.f32.mrb[0].mxu0
        %v1251 = vadd.f32 %v1079, %v1250
        %1252 = vdwg.mxu0
        %s1253 = sld [smem:[#allocation2]]
        %s1254 = sld [smem:[#allocation2 + $0x1]]
        %s1255 = sld [smem:[#allocation2 + $0x2]]
        %s1256 = sld [smem:[#allocation2 + $0x3]]
        %s1257 = sld [smem:[#allocation2 + $0x4]]
        %v1258 = vmul.f32 %v429, %v431
        %v1259 = vstv %s1253
        %v1260 = vmul.f32 %v433, %v1259
        %v1261 = vstv %s1254
        %v1262 = vmul.f32 %v1258, %v1261
        %v1263 = vadd.f32 %v1260, %v1262
        %v1268 = vcombine.low %v1166, %v1168
        %v1269 = vcombine.low %v1243, %v1245
        %v1271 = vunpack.c.l.s4 1966171168
        %v1272 = vunpack.c.0.s8 %v1271
        %v1273 = vlaneseq
        %v1274 = vshrl.u32 %v1273, 7
        %v1275 = vsub.s32 %v1272, %v1274
        %v1276 = vrot.slane %v1268, %v1275
        %v1278 = vunpack.c.l.s4 1966171168
        %v1279 = vunpack.c.0.s8 %v1278
        %v1280 = vlaneseq
        %v1281 = vshrl.u32 %v1280, 7
        %v1282 = vsub.s32 %v1279, %v1281
        %v1283 = vrot.slane %v1269, %v1282
        %v1284 = vcombine.low %v1276, %v1283
        %v1286 = vunpack.c.l.s4 1966171168
        %v1287 = vunpack.c.0.s8 %v1286
        %v1288 = vlaneseq
        %v1289 = vshrl.u32 %v1288, 7
        %v1290 = vsub.s32 %v1287, %v1289
        %v1291 = vrot.slane %v1284, %v1290
        %v1293 = vadd.f32 %v1263, %v1291
        %v1295 = vlaneseq
        %v1296 = vshrl.u32 %v1295, 7
        %v1297 = vsub.s32 0, %v1296
        %v1298 = vrot.slane %v431, %v1297
        %v1299 = vlaneseq
        %v1300 = vshrl.u32 %v1299, 7
        %v1301 = vsub.s32 1, %v1300
        %v1302 = vrot.slane %v431, %v1301
        %v1303 = vlaneseq
        %v1304 = vshrl.u32 %v1303, 7
        %v1305 = vsub.s32 2, %v1304
        %v1306 = vrot.slane %v431, %v1305
        %v1307 = vlaneseq
        %v1308 = vshrl.u32 %v1307, 7
        %v1309 = vsub.s32 3, %v1308
        %v1310 = vrot.slane %v431, %v1309
        %v1315 = vmul.f32 %v1166, %v1298
        %v1316 = vmul.f32 %v1168, %v1302
        %v1317 = vmul.f32 %v1243, %v1306
        %v1318 = vmul.f32 %v1245, %v1310
        %v1323 = vcombine.low %v1315, %v1316
        %v1324 = vcombine.low %v1317, %v1318
        %v1326 = vunpack.c.l.s4 1966171168
        %v1327 = vunpack.c.0.s8 %v1326
        %v1328 = vlaneseq
        %v1329 = vshrl.u32 %v1328, 7
        %v1330 = vsub.s32 %v1327, %v1329
        %v1331 = vrot.slane %v1323, %v1330
        %v1333 = vunpack.c.l.s4 1966171168
        %v1334 = vunpack.c.0.s8 %v1333
        %v1335 = vlaneseq
        %v1336 = vshrl.u32 %v1335, 7
        %v1337 = vsub.s32 %v1334, %v1336
        %v1338 = vrot.slane %v1324, %v1337
        %v1339 = vcombine.high %v1331, %v1338
        %v1341 = vunpack.c.l.s4 1966171168
        %v1342 = vunpack.c.0.s8 %v1341
        %v1343 = vlaneseq
        %v1344 = vshrl.u32 %v1343, 7
        %v1345 = vsub.s32 %v1342, %v1344
        %v1346 = vrot.slane %v1339, %v1345
        %v1347 = vcombine.high %v1346, %v1346
        %v1349 = vadd.f32 %v1293, %v1347
        %v1351 = vlaneseq
        %v1352 = vshrl.u32 %v1351, 7
        %v1353 = vsub.s32 0, %v1352
        %v1354 = vrot.slane %v433, %v1353
        %v1355 = vlaneseq
        %v1356 = vshrl.u32 %v1355, 7
        %v1357 = vsub.s32 1, %v1356
        %v1358 = vrot.slane %v433, %v1357
        %v1359 = vlaneseq
        %v1360 = vshrl.u32 %v1359, 7
        %v1361 = vsub.s32 2, %v1360
        %v1362 = vrot.slane %v433, %v1361
        %v1363 = vlaneseq
        %v1364 = vshrl.u32 %v1363, 7
        %v1365 = vsub.s32 3, %v1364
        %v1366 = vrot.slane %v433, %v1365
        %v1371 = vmul.f32 %v1166, %v1354
        %v1372 = vmul.f32 %v1168, %v1358
        %v1373 = vmul.f32 %v1243, %v1362
        %v1374 = vmul.f32 %v1245, %v1366
        %v1379 = vcombine.high %v1371, %v1372
        %v1380 = vcombine.high %v1373, %v1374
        %v1382 = vunpack.c.l.s4 1966171168
        %v1383 = vunpack.c.0.s8 %v1382
        %v1384 = vlaneseq
        %v1385 = vshrl.u32 %v1384, 7
        %v1386 = vsub.s32 %v1383, %v1385
        %v1387 = vrot.slane %v1379, %v1386
        %v1389 = vunpack.c.l.s4 1966171168
        %v1390 = vunpack.c.0.s8 %v1389
        %v1391 = vlaneseq
        %v1392 = vshrl.u32 %v1391, 7
        %v1393 = vsub.s32 %v1390, %v1392
        %v1394 = vrot.slane %v1380, %v1393
        %v1395 = vcombine.low %v1387, %v1394
        %v1397 = vunpack.c.l.s4 1966171168
        %v1398 = vunpack.c.0.s8 %v1397
        %v1399 = vlaneseq
        %v1400 = vshrl.u32 %v1399, 7
        %v1401 = vsub.s32 %v1398, %v1400
        %v1402 = vrot.slane %v1395, %v1401
        %v1404 = vadd.f32 %v1349, %v1402
        %v1405 = vmul.f32 %v429, %v429
        %v1406 = vstv %s1255
        %v1407 = vmul.f32 %v1405, %v1406
        %v1408 = vmul.f32 %v429, %v433
        %v1409 = vstv %s1256
        %v1410 = vmul.f32 %v1408, %v1409
        %v1411 = vadd.f32 %v1407, %v1410
        %v1412 = vcombine.high %v1276, %v1283
        %v1414 = vunpack.c.l.s4 1966171168
        %v1415 = vunpack.c.0.s8 %v1414
        %v1416 = vlaneseq
        %v1417 = vshrl.u32 %v1416, 7
        %v1418 = vsub.s32 %v1415, %v1417
        %v1419 = vrot.slane %v1412, %v1418
        %v1421 = vadd.f32 %v1411, %v1419
        %v1422 = vcombine.high %v1315, %v1316
        %v1423 = vcombine.high %v1317, %v1318
        %v1425 = vunpack.c.l.s4 1966171168
        %v1426 = vunpack.c.0.s8 %v1425
        %v1427 = vlaneseq
        %v1428 = vshrl.u32 %v1427, 7
        %v1429 = vsub.s32 %v1426, %v1428
        %v1430 = vrot.slane %v1422, %v1429
        %v1432 = vunpack.c.l.s4 1966171168
        %v1433 = vunpack.c.0.s8 %v1432
        %v1434 = vlaneseq
        %v1435 = vshrl.u32 %v1434, 7
        %v1436 = vsub.s32 %v1433, %v1435
        %v1437 = vrot.slane %v1423, %v1436
        %v1438 = vcombine.high %v1430, %v1437
        %v1440 = vunpack.c.l.s4 1966171168
        %v1441 = vunpack.c.0.s8 %v1440
        %v1442 = vlaneseq
        %v1443 = vshrl.u32 %v1442, 7
        %v1444 = vsub.s32 %v1441, %v1443
        %v1445 = vrot.slane %v1438, %v1444
        %v1447 = vadd.f32 %v1421, %v1445
        %v1448 = vcombine.high %v1402, %v1402
        %v1450 = vadd.f32 %v1447, %v1448
        %v1451 = vstv %s1257
        %v1452 = vmul.f32 %v1258, %v1451
        %v1453 = vcombine.high %v1291, %v1291
        %v1455 = vadd.f32 %v1452, %v1453
        %v1456 = vcombine.high %v1445, %v1445
        %v1458 = vadd.f32 %v1455, %v1456
        %v1459 = vmul.f32 %v1172, %v1298
        %v1460 = vmul.f32 %v1174, %v1302
        %v1461 = vmul.f32 %v1249, %v1306
        %v1462 = vmul.f32 %v1251, %v1310
        %v1467 = vcombine.low %v1459, %v1460
        %v1468 = vcombine.low %v1461, %v1462
        %v1470 = vunpack.c.l.s4 1966171168
        %v1471 = vunpack.c.0.s8 %v1470
        %v1472 = vlaneseq
        %v1473 = vshrl.u32 %v1472, 7
        %v1474 = vsub.s32 %v1471, %v1473
        %v1475 = vrot.slane %v1467, %v1474
        %v1477 = vunpack.c.l.s4 1966171168
        %v1478 = vunpack.c.0.s8 %v1477
        %v1479 = vlaneseq
        %v1480 = vshrl.u32 %v1479, 7
        %v1481 = vsub.s32 %v1478, %v1480
        %v1482 = vrot.slane %v1468, %v1481
        %v1483 = vcombine.low %v1475, %v1482
        %v1485 = vunpack.c.l.s4 1966171168
        %v1486 = vunpack.c.0.s8 %v1485
        %v1487 = vlaneseq
        %v1488 = vshrl.u32 %v1487, 7
        %v1489 = vsub.s32 %v1486, %v1488
        %v1490 = vrot.slane %v1483, %v1489
        %v1492 = vadd.f32 %v1458, %v1490
        %v1493 = vlaneseq
        %vm1494 = vcmp.ge.s32.totalorder %v1493, 0
        %vm1495 = vcmp.lt.s32.totalorder %v1493, 512
        %vm1496 = vmand %vm1494, %vm1495
        %1497 = vst.msk [vmem:[%s421] ss:$4 sm:$0xf] %vm1496, %v1404
        %s1498 = scalar_lea.vmem %s421, 1 [#allocation5]
        %1499 = vst.msk [vmem:[%s1498] ss:$4 sm:$0xf] %vm1496, %v1450
        %s1500 = scalar_lea.vmem %s421, 2 [#allocation5]
        %1501 = vst.msk [vmem:[%s1500] ss:$4 sm:$0xf] %vm1496, %v1492
        %s1502 = sand.u32 %s292, 1
        %s1503 = scalar_lea.sflag [#allocation3], %s1502
        %s1504 = sand.u32 %s292, 1
        %s1505 = smul.addr %s1504, 16
        %s1506 = scalar_lea.vmem [#allocation5], %s1505
        // Predicated region
        $region73: #{tpu_custom_call.1} parent=67 // pred_check
          %p1507 = pneg %p302
        $region74: #{tpu_custom_call.1} parent=67 // pred_check_branch
          %1509 = sbr.rel (%p1507) target = $region76
        $region75: #{tpu_custom_call.1} parent=67 // pred_region
          %s1510 = smul.u32 4, %s27
          %s1512 = ssub.s32 256, 256
          %1513 = vsyncadd %s1503, %s1512
          %s1514 = smul.addr %s1510, 64
          %s1515 = scalar_lea.hbm %s12, %s1514
          %s1517 = sshll.u32 %s1506, 4
          %s1518 = int_to_ptr.vmem [resolvable:$true] %s1517
          %1520 = dma.vmem_to_hbm [thread:$0]  %s1518, 256, %s1515, %s1503
        $region76: #{tpu_custom_call.1} parent=67 // pred_fallthru
          _
      $region68: #{tpu_custom_call.1} parent=5 // pred_fallthru
        _
      %p1521 = scmp.le.s32.totalorder 2, %s22
      // Predicated region
      $region77: #{tpu_custom_call.1} parent=5 // pred_check
        %p1522 = pneg %p1521
      $region78: #{tpu_custom_call.1} parent=5 // pred_check_branch
        %1524 = sbr.rel (%p1522) target = $region80
      $region79: #{tpu_custom_call.1} parent=5 // pred_region
        %s1525 = ssub.s32 %s22, 2
        // Predicated region
        $region81: #{tpu_custom_call.1} parent=79 // pred_check
          %p1526 = pneg %p308
        $region82: #{tpu_custom_call.1} parent=79 // pred_check_branch
          %1528 = sbr.rel (%p1526) target = $region84
        $region83: #{tpu_custom_call.1} parent=79 // pred_region
          %s1529 = sand.u32 %s293, 1
          %s1530 = scalar_lea.sflag [#allocation3], %s1529
          %s1531 = sand.u32 %s293, 1
          %s1532 = smul.addr %s1531, 16
          %s1533 = scalar_lea.vmem [#allocation5], %s1532
          %1534 = dma.done %s1530, 256
        $region84: #{tpu_custom_call.1} parent=79 // pred_fallthru
          _
      $region80: #{tpu_custom_call.1} parent=5 // pred_fallthru
        _
    $region6: #{tpu_custom_call.1} parent=1 // loop_footer
      %s26 = sadd.s32 1, %s22
    $region7: #{tpu_custom_call.1} parent=1 // loop_footer_branch
      %21 = sbr.rel target = $region3
    $region8: #{tpu_custom_call.1} parent=1 // loop_exit
      _
    %1535 = vsyncpa [#allocation3], 1
    %s1536 = scalar_lea.sflag [#allocation3], 1
    %1537 = vsyncpa %s1536, 1
    %1538 = vsyncpa [#allocation4], 1
    %s1539 = scalar_lea.sflag [#allocation4], 1
    %1540 = vsyncpa %s1539, 1

</llo_original>
